<compile_context>
chip_gen: v7x
topology: tpu7x:2x2x1
jax: 0.10.0
libtpu: 0.0.40
codegen_flags: <defaults>
</compile_context>

<pallas_src>
import functools

import jax
import jax.numpy as jnp
from jax import lax
from jax.experimental import pallas as pl
from jax.experimental.pallas import tpu as pltpu

LANE = 128


# ----------------------------------------------------------------------------
# Fused Bottleneck kernel
# ----------------------------------------------------------------------------
def _bottleneck_kernel(x_ref, xhbm_ref, w1_ref, b1_ref, w2_ref, b2_ref, o_ref,
                       tpad_ref, xhalo_ref, hsem,
                       *, TH, W, H, add, group_dx):
    # x_ref:    (1, TH, W, Cpi)   row-tile of the input (auto-pipelined, VMEM)
    # xhbm_ref: (N, H, W, Cpi)    same input in HBM (memory_space=ANY), halo rows only
    # w1_ref:   (Cpi, Cpm)        1x1 weights, BN scale folded in
    # b1_ref:   (1, Cpm)          folded BN bias (f32)
    # w2_ref:   (3, 3*Cpm, Cpo)   3x3 weights, per-dy im2col layout, BN scale folded in
    # b2_ref:   (1, Cpo)          folded BN bias (f32)
    # o_ref:    (1, TH, W, Cpo)   output row tile
    # tpad_ref: (TH+2, W+2, Cpm)  VMEM scratch: spatially zero-padded cv1 output
    # xhalo_ref:(2, 1, W, Cpi)    VMEM scratch for the two halo rows
    # hsem:     DMA semaphores (2,)
    n = pl.program_id(0)
    r = pl.program_id(1)
    row0 = r * TH
    Cpi = x_ref.shape[-1]
    Cpm = tpad_ref.shape[-1]
    Cpo = o_ref.shape[-1]
    maybe_partial = (H % TH) != 0                    # static

    has_top = r > 0
    has_bot = row0 + TH < H

    # Halo-row DMAs straight from HBM (input VMEM residency scales with TH, not H).
    top_src = jnp.maximum(row0 - 1, 0)               # clamped; only used when has_top
    bot_src = jnp.minimum(row0 + TH, H - 1)          # clamped; only used when has_bot
    top_cp = pltpu.make_async_copy(xhbm_ref.at[n, pl.ds(top_src, 1)],
                                   xhalo_ref.at[0], hsem.at[0])
    bot_cp = pltpu.make_async_copy(xhbm_ref.at[n, pl.ds(bot_src, 1)],
                                   xhalo_ref.at[1], hsem.at[1])

    @pl.when(has_top)
    def _():
        top_cp.start()

    @pl.when(has_bot)
    def _():
        bot_cp.start()

    w1 = w1_ref[...]
    b1 = b1_ref[...]

    # --- zero only the 1-pixel frame of the padded scratch (interior is overwritten) --
    col_zeros = jnp.zeros((TH + 2, 1, Cpm), tpad_ref.dtype)
    tpad_ref[:, 0:1, :] = col_zeros
    tpad_ref[:, W + 1:W + 2, :] = col_zeros

    @pl.when(jnp.logical_not(has_top))
    def _():
        tpad_ref[0:1, :, :] = jnp.zeros((1, W + 2, Cpm), tpad_ref.dtype)

    @pl.when(jnp.logical_not(has_bot))
    def _():
        tpad_ref[TH + 1:TH + 2, :, :] = jnp.zeros((1, W + 2, Cpm), tpad_ref.dtype)

    # --- cv1 on the TH main rows (block is already VMEM-resident) --------------------
    t = jnp.dot(x_ref[0].reshape(TH * W, Cpi), w1,
                preferred_element_type=jnp.float32)
    t = jnp.maximum(t + b1, 0.0).reshape(TH, W, Cpm)
    if maybe_partial:
        # Last tile may extend past H: zero cv1 of the invalid rows so they cannot
        # leak into the bottom halo of the last valid output row.
        ridx = lax.broadcasted_iota(jnp.int32, (TH, W, 1), 0)
        t = jnp.where(row0 + ridx < H, t, 0.0)
    tpad_ref[1:TH + 1, 1:W + 1, :] = t.astype(tpad_ref.dtype)

    # --- cv1 on the 1-row halos (manual DMA; skipped at the image border) ------------
    @pl.when(has_top)
    def _():
        top_cp.wait()
        h = jnp.dot(xhalo_ref[0, 0], w1, preferred_element_type=jnp.float32)
        h = jnp.maximum(h + b1, 0.0)
        tpad_ref[0:1, 1:W + 1, :] = h.reshape(1, W, Cpm).astype(tpad_ref.dtype)

    @pl.when(has_bot)
    def _():
        bot_cp.wait()
        h = jnp.dot(xhalo_ref[1, 0], w1, preferred_element_type=jnp.float32)
        h = jnp.maximum(h + b1, 0.0)
        tpad_ref[TH + 1:TH + 2, 1:W + 1, :] = h.reshape(1, W, Cpm).astype(tpad_ref.dtype)

    # --- cv2: 3x3 conv via accumulating matmuls (no full im2col staging buffer) ------
    acc = jnp.zeros((TH * W, Cpo), jnp.float32)
    if group_dx:
        # 3 matmuls of K = 3*Cpm (keeps v6e/v7x 256-deep MXU contraction full).
        for dy in range(3):
            slab = jnp.concatenate(
                [tpad_ref[dy:dy + TH, dx:dx + W, :] for dx in range(3)], axis=-1)
            acc = acc + jnp.dot(slab.reshape(TH * W, 3 * Cpm), w2_ref[dy],
                                preferred_element_type=jnp.float32)
    else:
        # 9 matmuls of K = Cpm (v5e: 128-deep MXU, avoid the concat's store traffic).
        for dy in range(3):
            for dx in range(3):
                patch = tpad_ref[dy:dy + TH, dx:dx + W, :].reshape(TH * W, Cpm)
                acc = acc + jnp.dot(patch, w2_ref[dy, dx * Cpm:(dx + 1) * Cpm, :],
                                    preferred_element_type=jnp.float32)

    y = jnp.maximum(acc + b2_ref[...], 0.0).reshape(TH, W, Cpo)
    if add:
        # Re-read the VMEM-resident input tile here (not held live across cv2).
        y = y + x_ref[0].astype(jnp.float32)
    o_ref[0] = y.astype(o_ref.dtype)


# ----------------------------------------------------------------------------
# Wrapper
# ----------------------------------------------------------------------------
def _round_up(v, m):
    return (v + m - 1) // m * m


def _device_defaults():
    kind = ""
    try:
        kind = jax.devices()[0].device_kind.lower()
    except Exception:
        pass
    if ("v7" in kind) or ("7x" in kind):
        # v7x: 64 MiB VMEM per TC, 2 TCs -> smaller tiles, tighter limit.
        return {"row_target": 16, "vmem_limit": 48 * 1024 * 1024, "group_dx": True}
    if ("v5 lite" in kind) or ("v5e" in kind) or ("v5lite" in kind):
        # v5e: 4x128^2 MXU -> per-tap K=128 already saturates; 128 MiB physical VMEM.
        return {"row_target": 32, "vmem_limit": 96 * 1024 * 1024, "group_dx": False}
    if "v6" in kind:
        return {"row_target": 32, "vmem_limit": 96 * 1024 * 1024, "group_dx": True}
    return {"row_target": 32, "vmem_limit": 64 * 1024 * 1024, "group_dx": True}


def bottleneck_forward_nhwc(x_nhwc, params, *, row_tile=None, dtype=jnp.bfloat16,
                            group_dx=None, vmem_limit=None):
    """Fused Bottleneck forward on NHWC input.  (N,H,W,C1) -> (N,H,W,C2).

    Use this entry point directly (keeping NHWC layout) when chaining Bottlenecks so
    the NCHW<->NHWC transposes are not paid per block."""
    p1, p2 = params["cv1"], params["cv2"]
    add = bool(params["add"])
    N, H, W, C1 = x_nhwc.shape
    Cmid = p1["w"].shape[-1]
    C2 = p2["w"].shape[-1]
    if add:
        assert C1 == C2

    dflt = _device_defaults()
    if row_tile is None:
        row_tile = dflt["row_target"]
    if group_dx is None:
        group_dx = dflt["group_dx"]
    if vmem_limit is None:
        vmem_limit = dflt["vmem_limit"]

    # Lane-pad channel dims to multiples of 128 (exact: zero weights/bias contribute 0).
    Cpi, Cpm, Cpo = (_round_up(c, LANE) for c in (C1, Cmid, C2))

    # Fold BN scale into conv weights; kernel only adds the folded bias.
    w1 = p1["w"][0, 0] * p1["scale"][None, :]                          # (C1, Cmid)
    w2 = p2["w"] * p2["scale"][None, None, None, :]                    # (3,3,Cmid,C2)

    x = x_nhwc.astype(dtype)
    if Cpi != C1:
        x = jnp.pad(x, ((0, 0), (0, 0), (0, 0), (0, Cpi - C1)))
    w1p = jnp.pad(w1, ((0, Cpi - C1), (0, Cpm - Cmid))).astype(dtype)
    b1p = jnp.pad(p1["bias"], (0, Cpm - Cmid)).astype(jnp.float32).reshape(1, Cpm)
    w2p = jnp.pad(w2, ((0, 0), (0, 0), (0, Cpm - Cmid), (0, Cpo - C2))).astype(dtype)
    w2p = w2p.reshape(3, 3 * Cpm, Cpo)                                 # per-dy im2col rows
    b2p = jnp.pad(p2["bias"], (0, Cpo - C2)).astype(jnp.float32).reshape(1, Cpo)

    TH = max(1, min(int(row_tile), H))
    RT = pl.cdiv(H, TH)                                                # masked last tile

    kernel = functools.partial(_bottleneck_kernel, TH=TH, W=W, H=H, add=add,
                               group_dx=bool(group_dx))

    out = pl.pallas_call(
        kernel,
        out_shape=jax.ShapeDtypeStruct((N, H, W, Cpo), dtype),
        grid=(N, RT),
        in_specs=[
            # Main TH rows: auto-pipelined row tile (VMEM residency scales with TH).
            pl.BlockSpec((1, TH, W, Cpi), lambda n, r: (n, r, 0, 0)),
            # Same tensor left in HBM; only the two 1-row halos are DMA'd manually.
            pl.BlockSpec(memory_space=pl.ANY),
            pl.BlockSpec((Cpi, Cpm), lambda n, r: (0, 0)),
            pl.BlockSpec((1, Cpm), lambda n, r: (0, 0)),
            pl.BlockSpec((3, 3 * Cpm, Cpo), lambda n, r: (0, 0, 0)),
            pl.BlockSpec((1, Cpo), lambda n, r: (0, 0)),
        ],
        out_specs=pl.BlockSpec((1, TH, W, Cpo), lambda n, r: (n, r, 0, 0)),
        scratch_shapes=[
            pltpu.VMEM((TH + 2, W + 2, Cpm), dtype),   # zero-padded cv1 output
            pltpu.VMEM((2, 1, W, Cpi), dtype),         # top/bottom halo rows
            pltpu.SemaphoreType.DMA((2,)),
        ],
        compiler_params=pltpu.CompilerParams(
            dimension_semantics=("parallel", "parallel"),
            vmem_limit_bytes=int(vmem_limit)),
    )(x, x, w1p, b1p, w2p, b2p)

    if Cpo != C2:
        out = out[..., :C2]
    return out


def bottleneck_forward_pallas(x_nchw, params, **kw):
    """PyTorch-interface wrapper: (N, C1, H, W) -> (N, C2, H, W)."""
    x = jnp.transpose(x_nchw, (0, 2, 3, 1))            # NCHW -> NHWC (avoid when chaining)
    out = bottleneck_forward_nhwc(x, params, **kw)
    return jnp.transpose(out, (0, 3, 1, 2))            # NHWC -> NCHW


# ----------------------------------------------------------------------------
# Deterministic parameter construction (Conv2d weight + folded BatchNorm)
# ----------------------------------------------------------------------------
def make_conv_params(key, cin, cout, k):
    kw, k1, k2, k3, k4 = jax.random.split(key, 5)
    fan_in = cin * k * k
    w = jax.random.normal(kw, (k, k, cin, cout), jnp.float32) / jnp.sqrt(fan_in)
    gamma = 1.0 + 0.1 * jax.random.normal(k1, (cout,), jnp.float32)
    beta = 0.1 * jax.random.normal(k2, (cout,), jnp.float32)
    mean = 0.1 * jax.random.normal(k3, (cout,), jnp.float32)
    var = 1.0 + 0.1 * jax.random.uniform(k4, (cout,), jnp.float32)
    eps = 1e-5
    scale = gamma / jnp.sqrt(var + eps)
    bias = beta - mean * scale
    return {"w": w, "scale": scale, "bias": bias}


def make_bottleneck_params(key, c1, c2, shortcut=True, g=1, e=0.5):
    assert g == 1
    c_ = int(c2 * e)
    k1, k2 = jax.random.split(key)
    return {
        "cv1": make_conv_params(k1, c1, c_, 1),
        "cv2": make_conv_params(k2, c_, c2, 3),
        "add": bool(shortcut and c1 == c2),
    }


# ----------------------------------------------------------------------------
# Pure-JAX reference
# ----------------------------------------------------------------------------
def _ref_conv(x_nhwc, p):
    y = lax.conv_general_dilated(x_nhwc, p["w"], (1, 1), "SAME",
                                 dimension_numbers=("NHWC", "HWIO", "NHWC"))
    return jnp.maximum(y * p["scale"] + p["bias"], 0.0)


def bottleneck_forward_ref(x_nchw, params):
    x = jnp.transpose(x_nchw, (0, 2, 3, 1)).astype(jnp.float32)
    y = _ref_conv(_ref_conv(x, params["cv1"]), params["cv2"])
    out = x + y if params["add"] else y
    return jnp.transpose(out, (0, 3, 1, 2))


# ----------------------------------------------------------------------------
if __name__ == "__main__":
    key = jax.random.PRNGKey(0)
    kx, kx2, kp1, kp2 = jax.random.split(key, 4)

    # Config 1: shortcut path (c1 == c2), 2 row tiles -> halo DMA paths exercised.
    # Both cv2 schedules (grouped-K for v6e/v7x, per-tap for v5e) are checked.
    N, C, H, W = 2, 8, 16, 16
    x = jax.random.normal(kx, (N, C, H, W), jnp.float32)
    params = make_bottleneck_params(kp1, C, C, shortcut=True, e=0.5)
    ref = jax.block_until_ready(bottleneck_forward_ref(x, params))

    for gdx in (True, False):
        out = jax.block_until_ready(
            bottleneck_forward_pallas(x, params, row_tile=8, dtype=jnp.float32,
                                      group_dx=gdx))
        assert out.shape == (N, C, H, W)
        assert jnp.allclose(out, ref, atol=1e-3, rtol=1e-3), \
            f"f32 shortcut mismatch (group_dx={gdx})"

    # Config 2: H not divisible by the row tile -> cdiv grid + masked last tile.
    H2 = 20
    x2 = jax.random.normal(kx2, (N, C, H2, W), jnp.float32)
    ref2 = jax.block_until_ready(bottleneck_forward_ref(x2, params))
    out2 = jax.block_until_ready(
        bottleneck_forward_pallas(x2, params, row_tile=8, dtype=jnp.float32))
    assert out2.shape == (N, C, H2, W)
    assert jnp.allclose(out2, ref2, atol=1e-3, rtol=1e-3), "partial-tile mismatch"

    # Config 3: c1 != c2 -> add=False branch (no residual), single row tile.
    params2 = make_bottleneck_params(kp2, C, 2 * C, shortcut=True, e=0.5)
    ref3 = jax.block_until_ready(bottleneck_forward_ref(x, params2))
    out3 = jax.block_until_ready(
        bottleneck_forward_pallas(x, params2, row_tile=16, dtype=jnp.float32))
    assert out3.shape == (N, 2 * C, H, W)
    assert jnp.allclose(out3, ref3, atol=1e-3, rtol=1e-3), "no-add mismatch"

    # Config 4: default bf16 activations/weights (f32 accumulation) -- loose check.
    out_bf16 = jax.block_until_ready(bottleneck_forward_pallas(x, params, row_tile=8))
    assert jnp.allclose(out_bf16.astype(jnp.float32), ref, atol=0.1, rtol=0.1), \
        "bf16 path mismatch"

    print("KERNEL_OK")
</pallas_src>

<mosaic_0001>
module attributes {stable_mosaic.version = 11 : i64} {
  func.func @_bottleneck_kernel(%arg0: i32, %arg1: i32, %arg2: memref<1x8x16x128xf32, #tpu.memory_space<vmem>>, %arg3: memref<2x16x16x128xf32, #tpu.memory_space<any>>, %arg4: memref<128x128xf32, #tpu.memory_space<vmem>>, %arg5: memref<1x128xf32, #tpu.memory_space<vmem>>, %arg6: memref<3x384x128xf32, #tpu.memory_space<vmem>>, %arg7: memref<1x128xf32, #tpu.memory_space<vmem>>, %arg8: memref<1x8x16x128xf32, #tpu.memory_space<vmem>>, %arg9: memref<10x18x128xf32, #tpu.memory_space<vmem>>, %arg10: memref<2x1x16x128xf32, #tpu.memory_space<vmem>>, %arg11: memref<2x!tpu.dma_semaphore, #tpu.memory_space<semaphore_mem>>) attributes {dimension_semantics = [#tpu.dimension_semantics<parallel>, #tpu.dimension_semantics<parallel>], iteration_bounds = array<i64: 2, 2>, scalar_prefetch = 0 : i64, scratch_operands = 3 : i64, tpu.core_type = #tpu.core_type<tc>, window_params = [{transform_indices = @transform_0, window_bounds = array<i64: 1, 8, 16, 128>}, {}, {pipeline_mode = #tpu.pipeline_mode<synchronous>, transform_indices = @transform_2, window_bounds = array<i64: 128, 128>}, {pipeline_mode = #tpu.pipeline_mode<synchronous>, transform_indices = @transform_3, window_bounds = array<i64: 1, 128>}, {pipeline_mode = #tpu.pipeline_mode<synchronous>, transform_indices = @transform_4, window_bounds = array<i64: 3, 384, 128>}, {pipeline_mode = #tpu.pipeline_mode<synchronous>, transform_indices = @transform_5, window_bounds = array<i64: 1, 128>}, {transform_indices = @transform_6, window_bounds = array<i64: 1, 8, 16, 128>}]} {
    %c8_i32 = arith.constant 8 : i32
    %0 = arith.muli %arg1, %c8_i32 : i32
    %c0_i32 = arith.constant 0 : i32
    %1 = arith.cmpi sgt, %arg1, %c0_i32 : i32
    %c8_i32_0 = arith.constant 8 : i32
    %2 = arith.addi %0, %c8_i32_0 : i32
    %c16_i32 = arith.constant 16 : i32
    %3 = arith.cmpi slt, %2, %c16_i32 : i32
    %c1_i32 = arith.constant 1 : i32
    %4 = arith.subi %0, %c1_i32 : i32
    %c0_i32_1 = arith.constant 0 : i32
    %5 = arith.maxsi %4, %c0_i32_1 : i32
    %c8_i32_2 = arith.constant 8 : i32
    %6 = arith.addi %0, %c8_i32_2 : i32
    %c15_i32 = arith.constant 15 : i32
    %7 = arith.minsi %6, %c15_i32 : i32
    %8 = arith.extui %1 : i1 to i32
    %c0_i32_3 = arith.constant 0 : i32
    %c0_i32_4 = arith.constant 0 : i32
    %c0_i32_5 = arith.constant 0 : i32
    %9 = arith.cmpi ne, %8, %c0_i32_5 : i32
    scf.if %9 {
      %c0_i32_84 = arith.constant 0 : i32
      %c0_i32_85 = arith.constant 0 : i32
      %77 = tpu.memref_slice %arg3[%arg0, %5, %c0_i32_84, %c0_i32_85] : memref<2x16x16x128xf32, #tpu.memory_space<any>> -> memref<1x1x16x128xf32, #tpu.memory_space<any>>
      %78 = tpu.memref_squeeze %77 : memref<1x1x16x128xf32, #tpu.memory_space<any>> -> memref<1x16x128xf32, #tpu.memory_space<any>>
      %c0_i32_86 = arith.constant 0 : i32
      %c0_i32_87 = arith.constant 0 : i32
      %c0_i32_88 = arith.constant 0 : i32
      %79 = tpu.memref_slice %arg10[%c0_i32_3, %c0_i32_86, %c0_i32_87, %c0_i32_88] : memref<2x1x16x128xf32, #tpu.memory_space<vmem>> -> memref<1x1x16x128xf32, #tpu.memory_space<vmem>>
      %80 = tpu.memref_squeeze %79 : memref<1x1x16x128xf32, #tpu.memory_space<vmem>> -> memref<1x16x128xf32, #tpu.memory_space<vmem>>
      %81 = tpu.memref_slice %arg11[%c0_i32_4] : memref<2x!tpu.dma_semaphore, #tpu.memory_space<semaphore_mem>> -> memref<1x!tpu.dma_semaphore, #tpu.memory_space<semaphore_mem>>
      %82 = tpu.memref_squeeze %81 : memref<1x!tpu.dma_semaphore, #tpu.memory_space<semaphore_mem>> -> memref<!tpu.dma_semaphore, #tpu.memory_space<semaphore_mem>>
      tpu.enqueue_dma source(%78 : memref<1x16x128xf32, #tpu.memory_space<any>>) target(%80 : memref<1x16x128xf32, #tpu.memory_space<vmem>>) target_semaphore(%82 : memref<!tpu.dma_semaphore, #tpu.memory_space<semaphore_mem>>)
    } else {
    }
    %10 = arith.extui %3 : i1 to i32
    %c1_i32_6 = arith.constant 1 : i32
    %c1_i32_7 = arith.constant 1 : i32
    %c0_i32_8 = arith.constant 0 : i32
    %11 = arith.cmpi ne, %10, %c0_i32_8 : i32
    scf.if %11 {
      %c0_i32_84 = arith.constant 0 : i32
      %c0_i32_85 = arith.constant 0 : i32
      %77 = tpu.memref_slice %arg3[%arg0, %7, %c0_i32_84, %c0_i32_85] : memref<2x16x16x128xf32, #tpu.memory_space<any>> -> memref<1x1x16x128xf32, #tpu.memory_space<any>>
      %78 = tpu.memref_squeeze %77 : memref<1x1x16x128xf32, #tpu.memory_space<any>> -> memref<1x16x128xf32, #tpu.memory_space<any>>
      %c0_i32_86 = arith.constant 0 : i32
      %c0_i32_87 = arith.constant 0 : i32
      %c0_i32_88 = arith.constant 0 : i32
      %79 = tpu.memref_slice %arg10[%c1_i32_6, %c0_i32_86, %c0_i32_87, %c0_i32_88] : memref<2x1x16x128xf32, #tpu.memory_space<vmem>> -> memref<1x1x16x128xf32, #tpu.memory_space<vmem>>
      %80 = tpu.memref_squeeze %79 : memref<1x1x16x128xf32, #tpu.memory_space<vmem>> -> memref<1x16x128xf32, #tpu.memory_space<vmem>>
      %81 = tpu.memref_slice %arg11[%c1_i32_7] : memref<2x!tpu.dma_semaphore, #tpu.memory_space<semaphore_mem>> -> memref<1x!tpu.dma_semaphore, #tpu.memory_space<semaphore_mem>>
      %82 = tpu.memref_squeeze %81 : memref<1x!tpu.dma_semaphore, #tpu.memory_space<semaphore_mem>> -> memref<!tpu.dma_semaphore, #tpu.memory_space<semaphore_mem>>
      tpu.enqueue_dma source(%78 : memref<1x16x128xf32, #tpu.memory_space<any>>) target(%80 : memref<1x16x128xf32, #tpu.memory_space<vmem>>) target_semaphore(%82 : memref<!tpu.dma_semaphore, #tpu.memory_space<semaphore_mem>>)
    } else {
    }
    %c0 = arith.constant 0 : index
    %c0_9 = arith.constant 0 : index
    %12 = vector.load %arg4[%c0, %c0_9] : memref<128x128xf32, #tpu.memory_space<vmem>>, vector<128x128xf32>
    %c0_10 = arith.constant 0 : index
    %c0_11 = arith.constant 0 : index
    %13 = vector.load %arg5[%c0_10, %c0_11] : memref<1x128xf32, #tpu.memory_space<vmem>>, vector<1x128xf32>
    %cst = arith.constant 0.000000e+00 : f32
    %14 = vector.broadcast %cst : f32 to vector<10x1x128xf32>
    %c0_12 = arith.constant 0 : index
    %c0_13 = arith.constant 0 : index
    %c0_14 = arith.constant 0 : index
    %15 = vector.load %arg9[%c0_12, %c0_13, %c0_14] : memref<10x18x128xf32, #tpu.memory_space<vmem>>, vector<10x1x128xf32>
    tpu.vector_store %arg9[%c0_12, %c0_13, %c0_14], %14 {strides = array<i32>} : memref<10x18x128xf32, #tpu.memory_space<vmem>>, vector<10x1x128xf32>,
    %c0_15 = arith.constant 0 : index
    %c17 = arith.constant 17 : index
    %c0_16 = arith.constant 0 : index
    %16 = vector.load %arg9[%c0_15, %c17, %c0_16] : memref<10x18x128xf32, #tpu.memory_space<vmem>>, vector<10x1x128xf32>
    tpu.vector_store %arg9[%c0_15, %c17, %c0_16], %14 {strides = array<i32>} : memref<10x18x128xf32, #tpu.memory_space<vmem>>, vector<10x1x128xf32>,
    %true = arith.constant true
    %17 = arith.xori %1, %true : i1
    %18 = arith.extui %17 : i1 to i32
    %c0_i32_17 = arith.constant 0 : i32
    %19 = arith.cmpi ne, %18, %c0_i32_17 : i32
    scf.if %19 {
      %cst_84 = arith.constant 0.000000e+00 : f32
      %77 = vector.broadcast %cst_84 : f32 to vector<1x18x128xf32>
      %c0_85 = arith.constant 0 : index
      %c0_86 = arith.constant 0 : index
      %c0_87 = arith.constant 0 : index
      %78 = vector.load %arg9[%c0_85, %c0_86, %c0_87] : memref<10x18x128xf32, #tpu.memory_space<vmem>>, vector<1x18x128xf32>
      tpu.vector_store %arg9[%c0_85, %c0_86, %c0_87], %77 {strides = array<i32>} : memref<10x18x128xf32, #tpu.memory_space<vmem>>, vector<1x18x128xf32>,
    } else {
    }
    %true_18 = arith.constant true
    %20 = arith.xori %3, %true_18 : i1
    %21 = arith.extui %20 : i1 to i32
    %c0_i32_19 = arith.constant 0 : i32
    %22 = arith.cmpi ne, %21, %c0_i32_19 : i32
    scf.if %22 {
      %cst_84 = arith.constant 0.000000e+00 : f32
      %77 = vector.broadcast %cst_84 : f32 to vector<1x18x128xf32>
      %c9 = arith.constant 9 : index
      %c0_85 = arith.constant 0 : index
      %c0_86 = arith.constant 0 : index
      %78 = vector.load %arg9[%c9, %c0_85, %c0_86] : memref<10x18x128xf32, #tpu.memory_space<vmem>>, vector<1x18x128xf32>
      tpu.vector_store %arg9[%c9, %c0_85, %c0_86], %77 {strides = array<i32>} : memref<10x18x128xf32, #tpu.memory_space<vmem>>, vector<1x18x128xf32>,
    } else {
    }
    %c0_20 = arith.constant 0 : index
    %c0_21 = arith.constant 0 : index
    %c0_22 = arith.constant 0 : index
    %c0_23 = arith.constant 0 : index
    %23 = vector.load %arg2[%c0_20, %c0_21, %c0_22, %c0_23] : memref<1x8x16x128xf32, #tpu.memory_space<vmem>>, vector<1x8x16x128xf32>
    %24 = vector.shape_cast %23 : vector<1x8x16x128xf32> to vector<8x16x128xf32>
    %25 = vector.shape_cast %24 : vector<8x16x128xf32> to vector<128x128xf32>
    %cst_24 = arith.constant dense<0.000000e+00> : vector<128x128xf32>
    %26 = tpu.matmul %25, %12, %cst_24 {dimension_numbers = #tpu.dot_dimension_numbers<[1], [0], [0], [1], [0, 0, 1, 1], [], []>} : vector<128x128xf32>, vector<128x128xf32>, vector<128x128xf32> -> vector<128x128xf32>
    %27 = vector.broadcast %13 : vector<1x128xf32> to vector<128x128xf32>
    %28 = arith.addf %26, %27 : vector<128x128xf32>
    %cst_25 = arith.constant 0.000000e+00 : f32
    %29 = vector.broadcast %cst_25 : f32 to vector<128x128xf32>
    %30 = arith.maximumf %28, %29 : vector<128x128xf32>
    %31 = vector.shape_cast %30 : vector<128x128xf32> to vector<8x16x128xf32>
    %c1 = arith.constant 1 : index
    %c1_26 = arith.constant 1 : index
    %c0_27 = arith.constant 0 : index
    %32 = vector.load %arg9[%c1, %c1_26, %c0_27] : memref<10x18x128xf32, #tpu.memory_space<vmem>>, vector<8x16x128xf32>
    tpu.vector_store %arg9[%c1, %c1_26, %c0_27], %31 {strides = array<i32>} : memref<10x18x128xf32, #tpu.memory_space<vmem>>, vector<8x16x128xf32>,
    %33 = arith.extui %1 : i1 to i32
    %c0_i32_28 = arith.constant 0 : i32
    %c0_i32_29 = arith.constant 0 : i32
    %c0_i32_30 = arith.constant 0 : i32
    %34 = arith.cmpi ne, %33, %c0_i32_30 : i32
    scf.if %34 {
      %c0_i32_84 = arith.constant 0 : i32
      %c0_i32_85 = arith.constant 0 : i32
      %77 = tpu.memref_slice %arg3[%arg0, %5, %c0_i32_84, %c0_i32_85] : memref<2x16x16x128xf32, #tpu.memory_space<any>> -> memref<1x1x16x128xf32, #tpu.memory_space<any>>
      %78 = tpu.memref_squeeze %77 : memref<1x1x16x128xf32, #tpu.memory_space<any>> -> memref<1x16x128xf32, #tpu.memory_space<any>>
      %c0_i32_86 = arith.constant 0 : i32
      %c0_i32_87 = arith.constant 0 : i32
      %c0_i32_88 = arith.constant 0 : i32
      %79 = tpu.memref_slice %arg10[%c0_i32_28, %c0_i32_86, %c0_i32_87, %c0_i32_88] : memref<2x1x16x128xf32, #tpu.memory_space<vmem>> -> memref<1x1x16x128xf32, #tpu.memory_space<vmem>>
      %80 = tpu.memref_squeeze %79 : memref<1x1x16x128xf32, #tpu.memory_space<vmem>> -> memref<1x16x128xf32, #tpu.memory_space<vmem>>
      %81 = tpu.memref_slice %arg11[%c0_i32_29] : memref<2x!tpu.dma_semaphore, #tpu.memory_space<semaphore_mem>> -> memref<1x!tpu.dma_semaphore, #tpu.memory_space<semaphore_mem>>
      %82 = tpu.memref_squeeze %81 : memref<1x!tpu.dma_semaphore, #tpu.memory_space<semaphore_mem>> -> memref<!tpu.dma_semaphore, #tpu.memory_space<semaphore_mem>>
      tpu.wait_dma2 semaphore(%82 : memref<!tpu.dma_semaphore, #tpu.memory_space<semaphore_mem>>) src(%78 : memref<1x16x128xf32, #tpu.memory_space<any>>) dst(%80 : memref<1x16x128xf32, #tpu.memory_space<vmem>>)
      %c0_89 = arith.constant 0 : index
      %c0_90 = arith.constant 0 : index
      %c0_91 = arith.constant 0 : index
      %c0_92 = arith.constant 0 : index
      %83 = vector.load %arg10[%c0_89, %c0_90, %c0_91, %c0_92] : memref<2x1x16x128xf32, #tpu.memory_space<vmem>>, vector<1x1x16x128xf32>
      %84 = vector.shape_cast %83 : vector<1x1x16x128xf32> to vector<16x128xf32>
      %cst_93 = arith.constant dense<0.000000e+00> : vector<16x128xf32>
      %85 = tpu.matmul %84, %12, %cst_93 {dimension_numbers = #tpu.dot_dimension_numbers<[1], [0], [0], [1], [0, 0, 1, 1], [], []>} : vector<16x128xf32>, vector<128x128xf32>, vector<16x128xf32> -> vector<16x128xf32>
      %86 = vector.broadcast %13 : vector<1x128xf32> to vector<16x128xf32>
      %87 = arith.addf %85, %86 : vector<16x128xf32>
      %cst_94 = arith.constant 0.000000e+00 : f32
      %88 = vector.broadcast %cst_94 : f32 to vector<16x128xf32>
      %89 = arith.maximumf %87, %88 : vector<16x128xf32>
      %90 = vector.shape_cast %89 : vector<16x128xf32> to vector<1x16x128xf32>
      %c0_95 = arith.constant 0 : index
      %c1_96 = arith.constant 1 : index
      %c0_97 = arith.constant 0 : index
      %91 = vector.load %arg9[%c0_95, %c1_96, %c0_97] : memref<10x18x128xf32, #tpu.memory_space<vmem>>, vector<1x16x128xf32>
      tpu.vector_store %arg9[%c0_95, %c1_96, %c0_97], %90 {strides = array<i32>} : memref<10x18x128xf32, #tpu.memory_space<vmem>>, vector<1x16x128xf32>,
    } else {
    }
    %35 = arith.extui %3 : i1 to i32
    %c1_i32_31 = arith.constant 1 : i32
    %c1_i32_32 = arith.constant 1 : i32
    %c0_i32_33 = arith.constant 0 : i32
    %36 = arith.cmpi ne, %35, %c0_i32_33 : i32
    scf.if %36 {
      %c0_i32_84 = arith.constant 0 : i32
      %c0_i32_85 = arith.constant 0 : i32
      %77 = tpu.memref_slice %arg3[%arg0, %7, %c0_i32_84, %c0_i32_85] : memref<2x16x16x128xf32, #tpu.memory_space<any>> -> memref<1x1x16x128xf32, #tpu.memory_space<any>>
      %78 = tpu.memref_squeeze %77 : memref<1x1x16x128xf32, #tpu.memory_space<any>> -> memref<1x16x128xf32, #tpu.memory_space<any>>
      %c0_i32_86 = arith.constant 0 : i32
      %c0_i32_87 = arith.constant 0 : i32
      %c0_i32_88 = arith.constant 0 : i32
      %79 = tpu.memref_slice %arg10[%c1_i32_31, %c0_i32_86, %c0_i32_87, %c0_i32_88] : memref<2x1x16x128xf32, #tpu.memory_space<vmem>> -> memref<1x1x16x128xf32, #tpu.memory_space<vmem>>
      %80 = tpu.memref_squeeze %79 : memref<1x1x16x128xf32, #tpu.memory_space<vmem>> -> memref<1x16x128xf32, #tpu.memory_space<vmem>>
      %81 = tpu.memref_slice %arg11[%c1_i32_32] : memref<2x!tpu.dma_semaphore, #tpu.memory_space<semaphore_mem>> -> memref<1x!tpu.dma_semaphore, #tpu.memory_space<semaphore_mem>>
      %82 = tpu.memref_squeeze %81 : memref<1x!tpu.dma_semaphore, #tpu.memory_space<semaphore_mem>> -> memref<!tpu.dma_semaphore, #tpu.memory_space<semaphore_mem>>
      tpu.wait_dma2 semaphore(%82 : memref<!tpu.dma_semaphore, #tpu.memory_space<semaphore_mem>>) src(%78 : memref<1x16x128xf32, #tpu.memory_space<any>>) dst(%80 : memref<1x16x128xf32, #tpu.memory_space<vmem>>)
      %c1_89 = arith.constant 1 : index
      %c0_90 = arith.constant 0 : index
      %c0_91 = arith.constant 0 : index
      %c0_92 = arith.constant 0 : index
      %83 = vector.load %arg10[%c1_89, %c0_90, %c0_91, %c0_92] : memref<2x1x16x128xf32, #tpu.memory_space<vmem>>, vector<1x1x16x128xf32>
      %84 = vector.shape_cast %83 : vector<1x1x16x128xf32> to vector<16x128xf32>
      %cst_93 = arith.constant dense<0.000000e+00> : vector<16x128xf32>
      %85 = tpu.matmul %84, %12, %cst_93 {dimension_numbers = #tpu.dot_dimension_numbers<[1], [0], [0], [1], [0, 0, 1, 1], [], []>} : vector<16x128xf32>, vector<128x128xf32>, vector<16x128xf32> -> vector<16x128xf32>
      %86 = vector.broadcast %13 : vector<1x128xf32> to vector<16x128xf32>
      %87 = arith.addf %85, %86 : vector<16x128xf32>
      %cst_94 = arith.constant 0.000000e+00 : f32
      %88 = vector.broadcast %cst_94 : f32 to vector<16x128xf32>
      %89 = arith.maximumf %87, %88 : vector<16x128xf32>
      %90 = vector.shape_cast %89 : vector<16x128xf32> to vector<1x16x128xf32>
      %c9 = arith.constant 9 : index
      %c1_95 = arith.constant 1 : index
      %c0_96 = arith.constant 0 : index
      %91 = vector.load %arg9[%c9, %c1_95, %c0_96] : memref<10x18x128xf32, #tpu.memory_space<vmem>>, vector<1x16x128xf32>
      tpu.vector_store %arg9[%c9, %c1_95, %c0_96], %90 {strides = array<i32>} : memref<10x18x128xf32, #tpu.memory_space<vmem>>, vector<1x16x128xf32>,
    } else {
    }
    %cst_34 = arith.constant 0.000000e+00 : f32
    %37 = vector.broadcast %cst_34 : f32 to vector<128x128xf32>
    %c0_35 = arith.constant 0 : index
    %c0_36 = arith.constant 0 : index
    %c0_37 = arith.constant 0 : index
    %38 = vector.load %arg9[%c0_35, %c0_36, %c0_37] : memref<10x18x128xf32, #tpu.memory_space<vmem>>, vector<8x16x128xf32>
    %c0_38 = arith.constant 0 : index
    %c1_39 = arith.constant 1 : index
    %c0_40 = arith.constant 0 : index
    %39 = vector.load %arg9[%c0_38, %c1_39, %c0_40] : memref<10x18x128xf32, #tpu.memory_space<vmem>>, vector<8x16x128xf32>
    %c0_41 = arith.constant 0 : index
    %c2 = arith.constant 2 : index
    %c0_42 = arith.constant 0 : index
    %40 = vector.load %arg9[%c0_41, %c2, %c0_42] : memref<10x18x128xf32, #tpu.memory_space<vmem>>, vector<8x16x128xf32>
    %41 = tpu.concatenate %38, %39, %40 in 2 : vector<8x16x128xf32>, vector<8x16x128xf32>, vector<8x16x128xf32> -> vector<8x16x384xf32>
    %42 = vector.shape_cast %41 : vector<8x16x384xf32> to vector<128x384xf32>
    %c0_43 = arith.constant 0 : index
    %c0_44 = arith.constant 0 : index
    %c0_45 = arith.constant 0 : index
    %43 = vector.load %arg6[%c0_43, %c0_44, %c0_45] : memref<3x384x128xf32, #tpu.memory_space<vmem>>, vector<1x384x128xf32>
    %44 = vector.shape_cast %43 : vector<1x384x128xf32> to vector<384x128xf32>
    %cst_46 = arith.constant dense<0.000000e+00> : vector<128x128xf32>
    %45 = tpu.matmul %42, %44, %cst_46 {dimension_numbers = #tpu.dot_dimension_numbers<[1], [0], [0], [1], [0, 0, 1, 1], [], []>} : vector<128x384xf32>, vector<384x128xf32>, vector<128x128xf32> -> vector<128x128xf32>
    %46 = arith.addf %37, %45 : vector<128x128xf32>
    %c1_47 = arith.constant 1 : index
    %c0_48 = arith.constant 0 : index
    %c0_49 = arith.constant 0 : index
    %47 = vector.load %arg9[%c1_47, %c0_48, %c0_49] : memref<10x18x128xf32, #tpu.memory_space<vmem>>, vector<8x16x128xf32>
    %c1_50 = arith.constant 1 : index
    %c1_51 = arith.constant 1 : index
    %c0_52 = arith.constant 0 : index
    %48 = vector.load %arg9[%c1_50, %c1_51, %c0_52] : memref<10x18x128xf32, #tpu.memory_space<vmem>>, vector<8x16x128xf32>
    %c1_53 = arith.constant 1 : index
    %c2_54 = arith.constant 2 : index
    %c0_55 = arith.constant 0 : index
    %49 = vector.load %arg9[%c1_53, %c2_54, %c0_55] : memref<10x18x128xf32, #tpu.memory_space<vmem>>, vector<8x16x128xf32>
    %50 = tpu.concatenate %47, %48, %49 in 2 : vector<8x16x128xf32>, vector<8x16x128xf32>, vector<8x16x128xf32> -> vector<8x16x384xf32>
    %51 = vector.shape_cast %50 : vector<8x16x384xf32> to vector<128x384xf32>
    %c1_56 = arith.constant 1 : index
    %c0_57 = arith.constant 0 : index
    %c0_58 = arith.constant 0 : index
    %52 = vector.load %arg6[%c1_56, %c0_57, %c0_58] : memref<3x384x128xf32, #tpu.memory_space<vmem>>, vector<1x384x128xf32>
    %53 = vector.shape_cast %52 : vector<1x384x128xf32> to vector<384x128xf32>
    %cst_59 = arith.constant dense<0.000000e+00> : vector<128x128xf32>
    %54 = tpu.matmul %51, %53, %cst_59 {dimension_numbers = #tpu.dot_dimension_numbers<[1], [0], [0], [1], [0, 0, 1, 1], [], []>} : vector<128x384xf32>, vector<384x128xf32>, vector<128x128xf32> -> vector<128x128xf32>
    %55 = arith.addf %46, %54 : vector<128x128xf32>
    %c2_60 = arith.constant 2 : index
    %c0_61 = arith.constant 0 : index
    %c0_62 = arith.constant 0 : index
    %56 = vector.load %arg9[%c2_60, %c0_61, %c0_62] : memref<10x18x128xf32, #tpu.memory_space<vmem>>, vector<8x16x128xf32>
    %c2_63 = arith.constant 2 : index
    %c1_64 = arith.constant 1 : index
    %c0_65 = arith.constant 0 : index
    %57 = vector.load %arg9[%c2_63, %c1_64, %c0_65] : memref<10x18x128xf32, #tpu.memory_space<vmem>>, vector<8x16x128xf32>
    %c2_66 = arith.constant 2 : index
    %c2_67 = arith.constant 2 : index
    %c0_68 = arith.constant 0 : index
    %58 = vector.load %arg9[%c2_66, %c2_67, %c0_68] : memref<10x18x128xf32, #tpu.memory_space<vmem>>, vector<8x16x128xf32>
    %59 = tpu.concatenate %56, %57, %58 in 2 : vector<8x16x128xf32>, vector<8x16x128xf32>, vector<8x16x128xf32> -> vector<8x16x384xf32>
    %60 = vector.shape_cast %59 : vector<8x16x384xf32> to vector<128x384xf32>
    %c2_69 = arith.constant 2 : index
    %c0_70 = arith.constant 0 : index
    %c0_71 = arith.constant 0 : index
    %61 = vector.load %arg6[%c2_69, %c0_70, %c0_71] : memref<3x384x128xf32, #tpu.memory_space<vmem>>, vector<1x384x128xf32>
    %62 = vector.shape_cast %61 : vector<1x384x128xf32> to vector<384x128xf32>
    %cst_72 = arith.constant dense<0.000000e+00> : vector<128x128xf32>
    %63 = tpu.matmul %60, %62, %cst_72 {dimension_numbers = #tpu.dot_dimension_numbers<[1], [0], [0], [1], [0, 0, 1, 1], [], []>} : vector<128x384xf32>, vector<384x128xf32>, vector<128x128xf32> -> vector<128x128xf32>
    %64 = arith.addf %55, %63 : vector<128x128xf32>
    %c0_73 = arith.constant 0 : index
    %c0_74 = arith.constant 0 : index
    %65 = vector.load %arg7[%c0_73, %c0_74] : memref<1x128xf32, #tpu.memory_space<vmem>>, vector<1x128xf32>
    %66 = vector.broadcast %65 : vector<1x128xf32> to vector<128x128xf32>
    %67 = arith.addf %64, %66 : vector<128x128xf32>
    %cst_75 = arith.constant 0.000000e+00 : f32
    %68 = vector.broadcast %cst_75 : f32 to vector<128x128xf32>
    %69 = arith.maximumf %67, %68 : vector<128x128xf32>
    %70 = vector.shape_cast %69 : vector<128x128xf32> to vector<8x16x128xf32>
    %c0_76 = arith.constant 0 : index
    %c0_77 = arith.constant 0 : index
    %c0_78 = arith.constant 0 : index
    %c0_79 = arith.constant 0 : index
    %71 = vector.load %arg2[%c0_76, %c0_77, %c0_78, %c0_79] : memref<1x8x16x128xf32, #tpu.memory_space<vmem>>, vector<1x8x16x128xf32>
    %72 = vector.shape_cast %71 : vector<1x8x16x128xf32> to vector<8x16x128xf32>
    %73 = arith.addf %70, %72 : vector<8x16x128xf32>
    %c0_80 = arith.constant 0 : index
    %c0_81 = arith.constant 0 : index
    %c0_82 = arith.constant 0 : index
    %c0_83 = arith.constant 0 : index
    %74 = vector.load %arg8[%c0_80, %c0_81, %c0_82, %c0_83] : memref<1x8x16x128xf32, #tpu.memory_space<vmem>>, vector<1x8x16x128xf32>
    %75 = vector.shape_cast %74 : vector<1x8x16x128xf32> to vector<8x16x128xf32>
    %76 = vector.shape_cast %73 : vector<8x16x128xf32> to vector<1x8x16x128xf32>
    tpu.vector_store %arg8[%c0_80, %c0_81, %c0_82, %c0_83], %76 {strides = array<i32>} : memref<1x8x16x128xf32, #tpu.memory_space<vmem>>, vector<1x8x16x128xf32>,
    return
  }
  func.func @transform_0(%arg0: i32, %arg1: i32) -> (i32, i32, i32, i32) {
    %c0_i32 = arith.constant 0 : i32
    %c0_i32_0 = arith.constant 0 : i32
    %c0_i32_1 = arith.constant 0 : i32
    return %arg0, %arg1, %c0_i32, %c0_i32_0 : i32, i32, i32, i32
  }
  func.func @transform_2(%arg0: i32, %arg1: i32) -> (i32, i32) {
    %c0_i32 = arith.constant 0 : i32
    %c0_i32_0 = arith.constant 0 : i32
    %c0_i32_1 = arith.constant 0 : i32
    return %c0_i32, %c0_i32_0 : i32, i32
  }
  func.func @transform_3(%arg0: i32, %arg1: i32) -> (i32, i32) {
    %c0_i32 = arith.constant 0 : i32
    %c0_i32_0 = arith.constant 0 : i32
    %c0_i32_1 = arith.constant 0 : i32
    return %c0_i32, %c0_i32_0 : i32, i32
  }
  func.func @transform_4(%arg0: i32, %arg1: i32) -> (i32, i32, i32) {
    %c0_i32 = arith.constant 0 : i32
    %c0_i32_0 = arith.constant 0 : i32
    %c0_i32_1 = arith.constant 0 : i32
    %c0_i32_2 = arith.constant 0 : i32
    return %c0_i32, %c0_i32_0, %c0_i32_1 : i32, i32, i32
  }
  func.func @transform_5(%arg0: i32, %arg1: i32) -> (i32, i32) {
    %c0_i32 = arith.constant 0 : i32
    %c0_i32_0 = arith.constant 0 : i32
    %c0_i32_1 = arith.constant 0 : i32
    return %c0_i32, %c0_i32_0 : i32, i32
  }
  func.func @transform_6(%arg0: i32, %arg1: i32) -> (i32, i32, i32, i32) {
    %c0_i32 = arith.constant 0 : i32
    %c0_i32_0 = arith.constant 0 : i32
    %c0_i32_1 = arith.constant 0 : i32
    return %arg0, %arg1, %c0_i32, %c0_i32_0 : i32, i32, i32, i32
  }
}

</mosaic_0001>

<llo_original>
// kernel: tpu_custom_call.1
$region0: #{tpu_custom_call.1}
  #allocation0 [shape = 'u32[]', space=smem, size = 0x4, offset = 0x4, fixed_abs, tag = 'smem constant byte address 0x4 - core index']
  #allocation1 [shape = 'u32[144,128]{1,0:T(1,128)}', space=vmem, size = 0x12000, scoped, tag = 'internal scratch']
  #allocation2 [shape = 'f32[10,18,128]{2,1,0:T(8,128)}', space=vmem, size = 0x1e000, scoped, tag = 'scratch operand']
  #allocation3 [shape = 'f32[2,1,16,128]{3,2,1,0:T(8,128)}', space=vmem, size = 0x4000, scoped, tag = 'scratch operand']
  #allocation4 [shape = 's32[2]{0}', space=sflag, size = 0x8, scoped, tag = 'scratch operand']
  #allocation15 [shape = 's32[]', space=sflag, size = 0x4, offset = 0, fixed_abs, tag = 'sflag constant byte address 0x0 - dummy sync flag']
  #allocation16 [shape = 's32[]', space=sflag, size = 0x4, offset = 0, fixed_abs, tag = 'sflag constant byte address 0x0 - dummy sync flag']
  #allocation17 [shape = 'u32[]', space=smem, size = 0x4, offset = 0x44, fixed_abs, tag = 'smem constant byte address 0x44 - assertion arg 0']
  #allocation18 [shape = 'u32[]', space=smem, size = 0x4, offset = 0x48, fixed_abs, tag = 'smem constant byte address 0x48 - assertion arg 1']
  #allocation19 [shape = 's32[]', space=sflag, size = 0x4, offset = 0, fixed_abs, tag = 'sflag constant byte address 0x0 - dummy sync flag']
  #allocation20 [shape = 's32[]', space=sflag, size = 0x4, offset = 0, fixed_abs, tag = 'sflag constant byte address 0x0 - dummy sync flag']
  %s0 = inlined_call_operand.hbm [shape: f32[2,16,16,128], index: 0, kind: input, shape index: {}]
  %s1 = inlined_call_operand.hbm [shape: f32[2,16,16,128], index: 1, kind: input, shape index: {}]
  %s2 = inlined_call_operand.hbm [shape: f32[128,128], index: 2, kind: input, shape index: {}]
  %s3 = inlined_call_operand.hbm [shape: f32[1,128], index: 3, kind: input, shape index: {}]
  %s4 = inlined_call_operand.hbm [shape: f32[3,384,128], index: 4, kind: input, shape index: {}]
  %s5 = inlined_call_operand.hbm [shape: f32[1,128], index: 5, kind: input, shape index: {}]
  %s6 = inlined_call_operand.hbm [shape: f32[2,16,16,128], index: 6, kind: output, shape index: {}]
  %s7 = sld [smem:[#allocation0]]
  $region105: #{tpu_custom_call.1} parent=0
    _
  %s9 = ssub.s32 1, %s7
  %s10 = scalar_select 0, %s9, %s7
  $region1: #{tpu_custom_call.1} parent=0
    #allocation5 [shape = 'u8[131072]{0}', space=vmem, size = 0x20000, scoped, tag = 'input window, operand 0']
    #allocation6 [shape = 's32[2]{0}', space=sflag, size = 0x8, scoped, tag = 'scoped memory for tpu_custom_call.1']
    #allocation7 [shape = 's32[2]{0}', space=sflag, size = 0x8, scoped, tag = 'scoped memory for tpu_custom_call.1']
    #allocation8 [shape = 'u8[65536]{0}', space=vmem, size = 0x10000, scoped, tag = 'input window, operand 2, single buffered']
    #allocation9 [shape = 's32[1]{0}', space=sflag, size = 0x4, scoped, tag = 'scoped memory for tpu_custom_call.1']
    #allocation10 [shape = 'u8[512]{0}', space=vmem, size = 0x400, scoped, tag = 'input window, operand 3, single buffered']
    #allocation11 [shape = 'u8[589824]{0}', space=vmem, size = 0x90000, scoped, tag = 'input window, operand 4, single buffered']
    #allocation12 [shape = 's32[1]{0}', space=sflag, size = 0x4, scoped, tag = 'scoped memory for tpu_custom_call.1']
    #allocation13 [shape = 'u8[512]{0}', space=vmem, size = 0x400, scoped, tag = 'input window, operand 5, single buffered']
    #allocation14 [shape = 'u8[131072]{0}', space=vmem, size = 0x20000, scoped, tag = 'output window, operand 0']
    %11 = vsyncpa [#allocation6], 0
    %s12 = scalar_lea.sflag [#allocation6], 1
    %13 = vsyncpa %s12, 0
    %14 = vsyncpa [#allocation9], 0
    %15 = vsyncpa [#allocation12], 0
    %16 = vsyncpa [#allocation7], 0
    %s17 = scalar_lea.sflag [#allocation7], 1
    %18 = vsyncpa %s17, 0
    loop: start=0, step=1, limit=6
    $region2: #{tpu_custom_call.1} parent=1 // loop_pre_header
      _
    $region3: #{tpu_custom_call.1} parent=1 // loop_header
      %s20 = sphi 0, %s24
      %p21 = scmp.ge.s32.totalorder %s20, 6
      %s27 = sphi 0, %s39
      %s28 = sphi 0, %s35
      %s29 = sphi 0, %s27
      %s30 = sphi 0, %s28
      %s31 = sphi 0, %s29
      %s32 = sphi 0, %s30
      %s44 = sphi 0, %s46
      %s47 = sphi 0, %s44
      %s48 = sphi 0, %s47
      %s64 = sphi 0, %s48
      %s68 = sphi 0, %s68
      %s70 = sphi 0, %s68
      %s71 = sphi 0, %s70
      %s85 = sphi 0, %s71
      %s89 = sphi 0, %s89
      %s91 = sphi 0, %s89
      %s92 = sphi 0, %s91
      %s106 = sphi 0, %s92
      %s110 = sphi 0, %s110
      %s112 = sphi 0, %s110
      %s113 = sphi 0, %s112
      %s127 = sphi 0, %s113
      %s131 = sphi 0, %s131
      %s133 = sphi 0, %s131
      %s134 = sphi 0, %s133
      %s148 = sphi 0, %s134
      %s156 = sphi 0, %s158
      %s159 = sphi 0, %s156
      %s160 = sphi 0, %s159
      %s176 = sphi 0, %s160
    $region4: #{tpu_custom_call.1} parent=1 // loop_header_branch
      %23 = sbr.rel (%p21) target = $region8
    $region5: #{tpu_custom_call.1} parent=1 // loop_body
      %s25 = ssub.s32 %s20, 1
      %s26 = ssub.s32 %s20, 2
      %s33 = sadd.s32 1, %s28
      %p34 = scmp.ge.s32.totalorder %s33, 2
      %s35 = scalar_select %p34, 0, %s33
      %s36 = sadd.s32 1, %s27
      %s37 = scalar_select %p34, %s36, %s27
      %p38 = scmp.ge.s32.totalorder %s37, 2
      %s39 = scalar_select %p38, 0, %s37
      %s40 = ssub.s32 %s27, %s39
      %s41 = ssub.s32 %s28, %s35
      %s42 = sor.u32 %s40, %s41
      %p43 = scmp.eq.s32.totalorder %s42, 0
      %s45 = sadd.s32 %s44, 1
      %s46 = scalar_select %p43, %s44, %s45
      %p49 = pneg %p43
      %p50 = scmp.eq.s32.totalorder %s20, 3
      %p51 = por %p49, %p50
      %p52 = scmp.ne.s32.totalorder %s44, %s47
      %p53 = scmp.eq.s32.totalorder %s20, 0
      %p54 = por %p52, %p53
      %p55 = scmp.ne.s32.totalorder %s44, %s47
      %p56 = scmp.eq.s32.totalorder %s25, 3
      %p57 = por %p55, %p56
      %p58 = scmp.ne.s32.totalorder %s47, %s48
      %p59 = scmp.eq.s32.totalorder %s25, 0
      %p60 = por %p58, %p59
      %p61 = scmp.ne.s32.totalorder %s47, %s48
      %p62 = scmp.eq.s32.totalorder %s26, 3
      %p63 = por %p61, %p62
      %p65 = scmp.ne.s32.totalorder %s48, %s64
      %p66 = scmp.eq.s32.totalorder %s26, 0
      %p67 = por %p65, %p66
      %s69 = sadd.s32 %s68, 1
      %p72 = scmp.eq.s32.totalorder %s20, 3
      %p73 = scmp.ne.s32.totalorder %s68, %s70
      %p74 = scmp.eq.s32.totalorder %s20, 0
      %p75 = por %p73, %p74
      %p76 = scmp.ne.s32.totalorder %s68, %s70
      %p77 = scmp.eq.s32.totalorder %s25, 3
      %p78 = por %p76, %p77
      %p79 = scmp.ne.s32.totalorder %s70, %s71
      %p80 = scmp.eq.s32.totalorder %s25, 0
      %p81 = por %p79, %p80
      %p82 = scmp.ne.s32.totalorder %s70, %s71
      %p83 = scmp.eq.s32.totalorder %s26, 3
      %p84 = por %p82, %p83
      %p86 = scmp.ne.s32.totalorder %s71, %s85
      %p87 = scmp.eq.s32.totalorder %s26, 0
      %p88 = por %p86, %p87
      %s90 = sadd.s32 %s89, 1
      %p93 = scmp.eq.s32.totalorder %s20, 3
      %p94 = scmp.ne.s32.totalorder %s89, %s91
      %p95 = scmp.eq.s32.totalorder %s20, 0
      %p96 = por %p94, %p95
      %p97 = scmp.ne.s32.totalorder %s89, %s91
      %p98 = scmp.eq.s32.totalorder %s25, 3
      %p99 = por %p97, %p98
      %p100 = scmp.ne.s32.totalorder %s91, %s92
      %p101 = scmp.eq.s32.totalorder %s25, 0
      %p102 = por %p100, %p101
      %p103 = scmp.ne.s32.totalorder %s91, %s92
      %p104 = scmp.eq.s32.totalorder %s26, 3
      %p105 = por %p103, %p104
      %p107 = scmp.ne.s32.totalorder %s92, %s106
      %p108 = scmp.eq.s32.totalorder %s26, 0
      %p109 = por %p107, %p108
      %s111 = sadd.s32 %s110, 1
      %p114 = scmp.eq.s32.totalorder %s20, 3
      %p115 = scmp.ne.s32.totalorder %s110, %s112
      %p116 = scmp.eq.s32.totalorder %s20, 0
      %p117 = por %p115, %p116
      %p118 = scmp.ne.s32.totalorder %s110, %s112
      %p119 = scmp.eq.s32.totalorder %s25, 3
      %p120 = por %p118, %p119
      %p121 = scmp.ne.s32.totalorder %s112, %s113
      %p122 = scmp.eq.s32.totalorder %s25, 0
      %p123 = por %p121, %p122
      %p124 = scmp.ne.s32.totalorder %s112, %s113
      %p125 = scmp.eq.s32.totalorder %s26, 3
      %p126 = por %p124, %p125
      %p128 = scmp.ne.s32.totalorder %s113, %s127
      %p129 = scmp.eq.s32.totalorder %s26, 0
      %p130 = por %p128, %p129
      %s132 = sadd.s32 %s131, 1
      %p135 = scmp.eq.s32.totalorder %s20, 3
      %p136 = scmp.ne.s32.totalorder %s131, %s133
      %p137 = scmp.eq.s32.totalorder %s20, 0
      %p138 = por %p136, %p137
      %p139 = scmp.ne.s32.totalorder %s131, %s133
      %p140 = scmp.eq.s32.totalorder %s25, 3
      %p141 = por %p139, %p140
      %p142 = scmp.ne.s32.totalorder %s133, %s134
      %p143 = scmp.eq.s32.totalorder %s25, 0
      %p144 = por %p142, %p143
      %p145 = scmp.ne.s32.totalorder %s133, %s134
      %p146 = scmp.eq.s32.totalorder %s26, 3
      %p147 = por %p145, %p146
      %p149 = scmp.ne.s32.totalorder %s134, %s148
      %p150 = scmp.eq.s32.totalorder %s26, 0
      %p151 = por %p149, %p150
      %s152 = ssub.s32 %s27, %s39
      %s153 = ssub.s32 %s28, %s35
      %s154 = sor.u32 %s152, %s153
      %p155 = scmp.eq.s32.totalorder %s154, 0
      %s157 = sadd.s32 %s156, 1
      %s158 = scalar_select %p155, %s156, %s157
      %p161 = pneg %p155
      %p162 = scmp.eq.s32.totalorder %s20, 3
      %p163 = por %p161, %p162
      %p164 = scmp.ne.s32.totalorder %s156, %s159
      %p165 = scmp.eq.s32.totalorder %s20, 0
      %p166 = por %p164, %p165
      %p167 = scmp.ne.s32.totalorder %s156, %s159
      %p168 = scmp.eq.s32.totalorder %s25, 3
      %p169 = por %p167, %p168
      %p170 = scmp.ne.s32.totalorder %s159, %s160
      %p171 = scmp.eq.s32.totalorder %s25, 0
      %p172 = por %p170, %p171
      %p173 = scmp.ne.s32.totalorder %s159, %s160
      %p174 = scmp.eq.s32.totalorder %s26, 3
      %p175 = por %p173, %p174
      %p177 = scmp.ne.s32.totalorder %s160, %s176
      %p178 = scmp.eq.s32.totalorder %s26, 0
      %p179 = por %p177, %p178
      %p180 = scmp.le.s32.totalorder 1, %s20
      %p181 = scmp.lt.s32.totalorder %s20, 5
      %p182 = pnand %p180, %p181
      %p183 = pneg %p182
      // Predicated region
      $region9: #{tpu_custom_call.1} parent=5 // pred_check
        _
      $region10: #{tpu_custom_call.1} parent=5 // pred_check_branch
        %185 = sbr.rel (%p182) target = $region12
      $region11: #{tpu_custom_call.1} parent=5 // pred_region
        %s186 = ssub.s32 %s20, 1
        // Predicated region
        $region13: #{tpu_custom_call.1} parent=11 // pred_check
          %p187 = pneg %p81
        $region14: #{tpu_custom_call.1} parent=11 // pred_check_branch
          %189 = sbr.rel (%p187) target = $region16
        $region15: #{tpu_custom_call.1} parent=11 // pred_region
          %s191 = ssub.s32 2048, 2048
          %192 = vsyncadd [#allocation9], %s191
          %s193 = sshll.u32 [#allocation8], 4
          %s194 = int_to_ptr.vmem [resolvable:$true] %s193
          %199 = dma.hbm_to_vmem [thread:$0]  %s2, 2048, %s194, [#allocation9], 128, 128, 8
        $region16: #{tpu_custom_call.1} parent=11 // pred_fallthru
          _
        // Predicated region
        $region17: #{tpu_custom_call.1} parent=11 // pred_check
          %p200 = pneg %p102
        $region18: #{tpu_custom_call.1} parent=11 // pred_check_branch
          %202 = sbr.rel (%p200) target = $region20
        $region19: #{tpu_custom_call.1} parent=11 // pred_region
          %s204 = ssub.s32 16, 16
          %205 = vsyncadd [#allocation9], %s204
          %s207 = sshll.u32 [#allocation10], 4
          %s208 = int_to_ptr.vmem [resolvable:$true] %s207
          %210 = dma.hbm_to_vmem [thread:$0]  %s3, 16, %s208, [#allocation9]
        $region20: #{tpu_custom_call.1} parent=11 // pred_fallthru
          _
        // Predicated region
        $region21: #{tpu_custom_call.1} parent=11 // pred_check
          %p211 = pneg %p123
        $region22: #{tpu_custom_call.1} parent=11 // pred_check_branch
          %213 = sbr.rel (%p211) target = $region24
        $region23: #{tpu_custom_call.1} parent=11 // pred_region
          %s215 = ssub.s32 18432, 18432
          %216 = vsyncadd [#allocation12], %s215
          %s217 = sshll.u32 [#allocation11], 4
          %s218 = int_to_ptr.vmem [resolvable:$true] %s217
          %223 = dma.hbm_to_vmem [thread:$0]  %s4, 18432, %s218, [#allocation12], 128, 128, 8
        $region24: #{tpu_custom_call.1} parent=11 // pred_fallthru
          _
        // Predicated region
        $region25: #{tpu_custom_call.1} parent=11 // pred_check
          %p224 = pneg %p144
        $region26: #{tpu_custom_call.1} parent=11 // pred_check_branch
          %226 = sbr.rel (%p224) target = $region28
        $region27: #{tpu_custom_call.1} parent=11 // pred_region
          %s228 = ssub.s32 16, 16
          %229 = vsyncadd [#allocation12], %s228
          %s231 = sshll.u32 [#allocation13], 4
          %s232 = int_to_ptr.vmem [resolvable:$true] %s231
          %234 = dma.hbm_to_vmem [thread:$0]  %s5, 16, %s232, [#allocation12]
        $region28: #{tpu_custom_call.1} parent=11 // pred_fallthru
          _
      $region12: #{tpu_custom_call.1} parent=5 // pred_fallthru
        _
      %p235 = scmp.lt.s32.totalorder %s20, 4
      // Predicated region
      $region29: #{tpu_custom_call.1} parent=5 // pred_check
        %p236 = pneg %p235
      $region30: #{tpu_custom_call.1} parent=5 // pred_check_branch
        %238 = sbr.rel (%p236) target = $region32
      $region31: #{tpu_custom_call.1} parent=5 // pred_region
        // Predicated region
        $region33: #{tpu_custom_call.1} parent=31 // pred_check
          %p239 = pneg %p54
        $region34: #{tpu_custom_call.1} parent=31 // pred_check_branch
          %241 = sbr.rel (%p239) target = $region36
        $region35: #{tpu_custom_call.1} parent=31 // pred_region
          %s242 = sand.u32 %s44, 1
          %s243 = scalar_lea.sflag [#allocation6], %s242
          %s244 = sand.u32 %s44, 1
          %s245 = smul.addr %s244, 128
          %s246 = scalar_lea.vmem [#allocation5], %s245
          %s247 = smul.u32 8, %s28
          %s249 = ssub.s32 2048, 2048
          %250 = vsyncadd %s243, %s249
          %s251 = smul.addr %s247, 2
          %s252 = smul.addr %s27, 32
          %s253 = sadd.s32 %s251, %s252
          %s254 = smul.addr %s253, 128
          %s255 = scalar_lea.hbm %s0, %s254
          %s256 = sshll.u32 %s246, 4
          %s257 = int_to_ptr.vmem [resolvable:$true] %s256
          %262 = dma.hbm_to_vmem [thread:$0]  %s255, 2048, %s257, %s243, 128, 128, 8
        $region36: #{tpu_custom_call.1} parent=31 // pred_fallthru
          _
      $region32: #{tpu_custom_call.1} parent=5 // pred_fallthru
        _
      %p263 = scmp.le.s32.totalorder 1, %s20
      %p264 = scmp.lt.s32.totalorder %s20, 5
      %p265 = pnand %p263, %p264
      %p266 = pneg %p265
      // Predicated region
      $region37: #{tpu_custom_call.1} parent=5 // pred_check
        _
      $region38: #{tpu_custom_call.1} parent=5 // pred_check_branch
        %268 = sbr.rel (%p265) target = $region40
      $region39: #{tpu_custom_call.1} parent=5 // pred_region
        %s269 = ssub.s32 %s20, 1
        %s270 = sand.u32 %s47, 1
        %s271 = scalar_lea.sflag [#allocation6], %s270
        %s272 = sand.u32 %s47, 1
        %s273 = smul.addr %s272, 128
        %s274 = scalar_lea.vmem [#allocation5], %s273
        // Predicated region
        $region41: #{tpu_custom_call.1} parent=39 // pred_check
          %p275 = pneg %p60
        $region42: #{tpu_custom_call.1} parent=39 // pred_check_branch
          %277 = sbr.rel (%p275) target = $region44
        $region43: #{tpu_custom_call.1} parent=39 // pred_region
          %278 = dma.done %s271, 2048
        $region44: #{tpu_custom_call.1} parent=39 // pred_fallthru
          _
        // Predicated region
        $region45: #{tpu_custom_call.1} parent=39 // pred_check
          %p279 = pneg %p81
        $region46: #{tpu_custom_call.1} parent=39 // pred_check_branch
          %281 = sbr.rel (%p279) target = $region48
        $region47: #{tpu_custom_call.1} parent=39 // pred_region
          %282 = dma.done [#allocation9], 2048
        $region48: #{tpu_custom_call.1} parent=39 // pred_fallthru
          _
        // Predicated region
        $region49: #{tpu_custom_call.1} parent=39 // pred_check
          %p283 = pneg %p102
        $region50: #{tpu_custom_call.1} parent=39 // pred_check_branch
          %285 = sbr.rel (%p283) target = $region52
        $region51: #{tpu_custom_call.1} parent=39 // pred_region
          %286 = dma.done [#allocation9], 16
        $region52: #{tpu_custom_call.1} parent=39 // pred_fallthru
          _
        // Predicated region
        $region53: #{tpu_custom_call.1} parent=39 // pred_check
          %p287 = pneg %p123
        $region54: #{tpu_custom_call.1} parent=39 // pred_check_branch
          %289 = sbr.rel (%p287) target = $region56
        $region55: #{tpu_custom_call.1} parent=39 // pred_region
          %290 = dma.done [#allocation12], 18432
        $region56: #{tpu_custom_call.1} parent=39 // pred_fallthru
          _
        // Predicated region
        $region57: #{tpu_custom_call.1} parent=39 // pred_check
          %p291 = pneg %p144
        $region58: #{tpu_custom_call.1} parent=39 // pred_check_branch
          %293 = sbr.rel (%p291) target = $region60
        $region59: #{tpu_custom_call.1} parent=39 // pred_region
          %294 = dma.done [#allocation12], 16
        $region60: #{tpu_custom_call.1} parent=39 // pred_fallthru
          _
        %s295 = sand.u32 %s47, 1
        %s296 = scalar_lea.sflag [#allocation6], %s295
        %s297 = sand.u32 %s47, 1
        %s298 = smul.addr %s297, 128
        %s299 = scalar_lea.vmem [#allocation5], %s298
        %p300 = pneg %p60
        %p301 = pneg %p57
        %p302 = pneg %p81
        %p303 = pneg %p78
        %p304 = pneg %p102
        %p305 = pneg %p99
        %p306 = pneg %p123
        %p307 = pneg %p120
        %p308 = pneg %p144
        %p309 = pneg %p141
        %p310 = pneg %p172
        %p311 = pneg %p169
        %s312 = sand.u32 %s159, 1
        %s313 = scalar_lea.sflag [#allocation7], %s312
        %s314 = sand.u32 %s159, 1
        %s315 = smul.addr %s314, 128
        %s316 = scalar_lea.vmem [#allocation14], %s315
        %s317 = smul.u32 8, %s30
        %s318 = smul.u32 8, %s30
        %s319 = smul.u32 %s30, 8
        %p320 = scmp.gt.s32.totalorder %s30, 0
        %s321 = sadd.s32 %s319, 8
        %p322 = scmp.lt.s32.totalorder %s321, 16
        %s323 = ssub.s32 %s319, 1
        %p324 = scmp.gt.s32.totalorder %s323, 0
        %s325 = scalar_select %p324, %s323, 0
        %p326 = scmp.lt.s32.totalorder %s321, 15
        %s327 = scalar_select %p326, %s321, 15
        // Predicated region
        $region61: #{tpu_custom_call.1} parent=39 // pred_check
          %p328 = pneg %p320
        $region62: #{tpu_custom_call.1} parent=39 // pred_check_branch
          %330 = sbr.rel (%p328) target = $region64
        $region63: #{tpu_custom_call.1} parent=39 // pred_region
          %s331 = smul.u32 %s325, 16
          %s332 = smul.u32 %s29, 256
          %s333 = sadd.s32 %s331, %s332
          %s334 = smul.addr %s333, 16
          %s335 = scalar_lea.hbm %s1, %s334
          // Predicated region
          $region65: #{tpu_custom_call.1} parent=63 // pred_check
            _
          $region66: #{tpu_custom_call.1} parent=63 // pred_check_branch
            %337 = sbr.rel target = $region68
          $region67: #{tpu_custom_call.1} parent=63 // pred_region
            %338 = sst [smem:[#allocation17]] [#allocation16]
            %339 = sst [smem:[#allocation18]] [#allocation15]
          $region68: #{tpu_custom_call.1} parent=63 // pred_fallthru
            _
          %341 = shalt.err (0)
          %s343 = sshll.u32 [#allocation3], 4
          %s344 = int_to_ptr.vmem [resolvable:$true] %s343
          %346 = dma.hbm_to_vmem [thread:$0]  %s335, 256, %s344, [#allocation4]
        $region64: #{tpu_custom_call.1} parent=39 // pred_fallthru
          _
        // Predicated region
        $region69: #{tpu_custom_call.1} parent=39 // pred_check
          %p347 = pneg %p322
        $region70: #{tpu_custom_call.1} parent=39 // pred_check_branch
          %349 = sbr.rel (%p347) target = $region72
        $region71: #{tpu_custom_call.1} parent=39 // pred_region
          %s350 = smul.u32 %s327, 16
          %s351 = smul.u32 %s29, 256
          %s352 = sadd.s32 %s350, %s351
          %s353 = smul.addr %s352, 16
          %s354 = scalar_lea.hbm %s1, %s353
          %s355 = scalar_lea.vmem [#allocation3], 16
          %s356 = scalar_lea.sflag [#allocation4], 1
          // Predicated region
          $region73: #{tpu_custom_call.1} parent=71 // pred_check
            _
          $region74: #{tpu_custom_call.1} parent=71 // pred_check_branch
            %358 = sbr.rel target = $region76
          $region75: #{tpu_custom_call.1} parent=71 // pred_region
            %359 = sst [smem:[#allocation17]] [#allocation20]
            %360 = sst [smem:[#allocation18]] [#allocation19]
          $region76: #{tpu_custom_call.1} parent=71 // pred_fallthru
            _
          %362 = shalt.err (0)
          %s364 = sshll.u32 %s355, 4
          %s365 = int_to_ptr.vmem [resolvable:$true] %s364
          %367 = dma.hbm_to_vmem [thread:$0]  %s354, 256, %s365, %s356
        $region72: #{tpu_custom_call.1} parent=39 // pred_fallthru
          _
        %v368 = vld [vmem:[#allocation8] sm:$0xff]
        %v369 = vld [vmem:[#allocation8 + $0x8] sm:$0xff]
        %v370 = vld [vmem:[#allocation8 + $0x10] sm:$0xff]
        %v371 = vld [vmem:[#allocation8 + $0x18] sm:$0xff]
        %v372 = vld [vmem:[#allocation8 + $0x20] sm:$0xff]
        %v373 = vld [vmem:[#allocation8 + $0x28] sm:$0xff]
        %v374 = vld [vmem:[#allocation8 + $0x30] sm:$0xff]
        %v375 = vld [vmem:[#allocation8 + $0x38] sm:$0xff]
        %v376 = vld [vmem:[#allocation8 + $0x40] sm:$0xff]
        %v377 = vld [vmem:[#allocation8 + $0x48] sm:$0xff]
        %v378 = vld [vmem:[#allocation8 + $0x50] sm:$0xff]
        %v379 = vld [vmem:[#allocation8 + $0x58] sm:$0xff]
        %v380 = vld [vmem:[#allocation8 + $0x60] sm:$0xff]
        %v381 = vld [vmem:[#allocation8 + $0x68] sm:$0xff]
        %v382 = vld [vmem:[#allocation8 + $0x70] sm:$0xff]
        %v383 = vld [vmem:[#allocation8 + $0x78] sm:$0xff]
        %v384 = vld [vmem:[#allocation10] sm:$0x1]
        %385 = vst [vmem:[#allocation2] sm:$0x1] 0.0
        %386 = vst [vmem:[#allocation2 + $0x18] sm:$0x1] 0.0
        %387 = vst [vmem:[#allocation2 + $0x30] sm:$0x1] 0.0
        %388 = vst [vmem:[#allocation2 + $0x48] sm:$0x1] 0.0
        %389 = vst [vmem:[#allocation2 + $0x60] sm:$0x1] 0.0
        %390 = vst [vmem:[#allocation2 + $0x78] sm:$0x1] 0.0
        %391 = vst [vmem:[#allocation2 + $0x90] sm:$0x1] 0.0
        %392 = vst [vmem:[#allocation2 + $0xa8] sm:$0x1] 0.0
        %393 = vst [vmem:[#allocation2 + $0xc0] sm:$0x1] 0.0
        %394 = vst [vmem:[#allocation2 + $0xd8] sm:$0x1] 0.0
        %395 = vst [vmem:[#allocation2 + $0x11] sm:$0x1] 0.0
        %396 = vst [vmem:[#allocation2 + $0x29] sm:$0x1] 0.0
        %397 = vst [vmem:[#allocation2 + $0x41] sm:$0x1] 0.0
        %398 = vst [vmem:[#allocation2 + $0x59] sm:$0x1] 0.0
        %399 = vst [vmem:[#allocation2 + $0x71] sm:$0x1] 0.0
        %400 = vst [vmem:[#allocation2 + $0x89] sm:$0x1] 0.0
        %401 = vst [vmem:[#allocation2 + $0xa1] sm:$0x1] 0.0
        %402 = vst [vmem:[#allocation2 + $0xb9] sm:$0x1] 0.0
        %403 = vst [vmem:[#allocation2 + $0xd1] sm:$0x1] 0.0
        %404 = vst [vmem:[#allocation2 + $0xe9] sm:$0x1] 0.0
        %p405 = scmp.le.s32.totalorder %s30, 0
        // Predicated region
        $region77: #{tpu_custom_call.1} parent=39 // pred_check
          %p406 = pneg %p405
        $region78: #{tpu_custom_call.1} parent=39 // pred_check_branch
          %408 = sbr.rel (%p406) target = $region80
        $region79: #{tpu_custom_call.1} parent=39 // pred_region
          %409 = vst [vmem:[#allocation2] sm:$0xff] 0.0
          %410 = vst [vmem:[#allocation2 + $0x8] sm:$0xff] 0.0
          %411 = vst [vmem:[#allocation2 + $0x10] sm:$0x3] 0.0
        $region80: #{tpu_custom_call.1} parent=39 // pred_fallthru
          _
        %p412 = scmp.ge.s32.totalorder %s321, 16
        // Predicated region
        $region81: #{tpu_custom_call.1} parent=39 // pred_check
          %p413 = pneg %p412
        $region82: #{tpu_custom_call.1} parent=39 // pred_check_branch
          %415 = sbr.rel (%p413) target = $region84
        $region83: #{tpu_custom_call.1} parent=39 // pred_region
          %s416 = scalar_lea.vmem [#allocation2], 216
          %417 = vst [vmem:[%s416] sm:$0xff] 0.0
          %418 = vst [vmem:[%s416 + $0x8] sm:$0xff] 0.0
          %419 = vst [vmem:[%s416 + $0x10] sm:$0x3] 0.0
        $region84: #{tpu_custom_call.1} parent=39 // pred_fallthru
          _
        %v420 = vld [vmem:[%s274] sm:$0xff]
        %v421 = vld [vmem:[%s274 + $0x8] sm:$0xff]
        %v422 = vld [vmem:[%s274 + $0x10] sm:$0xff]
        %v423 = vld [vmem:[%s274 + $0x18] sm:$0xff]
        %v424 = vld [vmem:[%s274 + $0x20] sm:$0xff]
        %v425 = vld [vmem:[%s274 + $0x28] sm:$0xff]
        %v426 = vld [vmem:[%s274 + $0x30] sm:$0xff]
        %v427 = vld [vmem:[%s274 + $0x38] sm:$0xff]
        %v428 = vld [vmem:[%s274 + $0x40] sm:$0xff]
        %v429 = vld [vmem:[%s274 + $0x48] sm:$0xff]
        %v430 = vld [vmem:[%s274 + $0x50] sm:$0xff]
        %v431 = vld [vmem:[%s274 + $0x58] sm:$0xff]
        %v432 = vld [vmem:[%s274 + $0x60] sm:$0xff]
        %v433 = vld [vmem:[%s274 + $0x68] sm:$0xff]
        %v434 = vld [vmem:[%s274 + $0x70] sm:$0xff]
        %v435 = vld [vmem:[%s274 + $0x78] sm:$0xff]
        %v437 = vlaneseq
        %v438 = vshrl.u32 %v437, 7
        %v439 = vsub.s32 0, %v438
        %v440 = vrot.slane %v384, %v439
        %442 = vmatprep.subr.mxu0 0.0
        %443 = vmatpush1.msra.mxu0 %v368
        %444 = vmatprep.subr.mxu0 0.0
        %445 = vmatpush1.msra.mxu0 %v369
        %446 = vmatprep.subr.mxu0 0.0
        %447 = vmatpush1.msra.mxu0 %v370
        %448 = vmatprep.subr.mxu0 0.0
        %449 = vmatpush1.msra.mxu0 %v371
        %450 = vmatprep.subr.mxu0 0.0
        %451 = vmatpush1.msra.mxu0 %v372
        %452 = vmatprep.subr.mxu0 0.0
        %453 = vmatpush1.msra.mxu0 %v373
        %454 = vmatprep.subr.mxu0 0.0
        %455 = vmatpush1.msra.mxu0 %v374
        %456 = vmatprep.subr.mxu0 0.0
        %457 = vmatpush1.msra.mxu0 %v375
        %458 = vmatprep.subr.mxu0 0.0
        %459 = vmatpush1.msra.mxu0 %v376
        %460 = vmatprep.subr.mxu0 0.0
        %461 = vmatpush1.msra.mxu0 %v377
        %462 = vmatprep.subr.mxu0 0.0
        %463 = vmatpush1.msra.mxu0 %v378
        %464 = vmatprep.subr.mxu0 0.0
        %465 = vmatpush1.msra.mxu0 %v379
        %466 = vmatprep.subr.mxu0 0.0
        %467 = vmatpush1.msra.mxu0 %v380
        %468 = vmatprep.subr.mxu0 0.0
        %469 = vmatpush1.msra.mxu0 %v381
        %470 = vmatprep.subr.mxu0 0.0
        %471 = vmatpush1.msra.mxu0 %v382
        %472 = vmatprep.subr.mxu0 0.0
        %473 = vmatpush1.msra.mxu0 %v383
        %474 = vmatprep.subr.mxu0 0.0
        %475 = vmatpush1.msra.mxu0 0.0
        %476 = vmatprep.subr.mxu0 0.0
        %477 = vmatpush1.msra.mxu0 0.0
        %478 = vmatprep.subr.mxu0 0.0
        %479 = vmatpush1.msra.mxu0 0.0
        %480 = vmatprep.subr.mxu0 0.0
        %481 = vmatpush1.msra.mxu0 0.0
        %482 = vmatprep.subr.mxu0 0.0
        %483 = vmatpush1.msra.mxu0 0.0
        %484 = vmatprep.subr.mxu0 0.0
        %485 = vmatpush1.msra.mxu0 0.0
        %486 = vmatprep.subr.mxu0 0.0
        %487 = vmatpush1.msra.mxu0 0.0
        %488 = vmatprep.subr.mxu0 0.0
        %489 = vmatpush1.msra.mxu0 0.0
        %490 = vmatprep.subr.mxu0 0.0
        %491 = vmatpush1.msra.mxu0 0.0
        %492 = vmatprep.subr.mxu0 0.0
        %493 = vmatpush1.msra.mxu0 0.0
        %494 = vmatprep.subr.mxu0 0.0
        %495 = vmatpush1.msra.mxu0 0.0
        %496 = vmatprep.subr.mxu0 0.0
        %497 = vmatpush1.msra.mxu0 0.0
        %498 = vmatprep.subr.mxu0 0.0
        %499 = vmatpush1.msra.mxu0 0.0
        %500 = vmatprep.subr.mxu0 0.0
        %501 = vmatpush1.msra.mxu0 0.0
        %502 = vmatprep.subr.mxu0 0.0
        %503 = vmatpush1.msra.mxu0 0.0
        %504 = vmatprep.subr.mxu0 0.0
        %505 = vmatpush1.msra.mxu0 0.0
        %506 = vmatprep.mubr.f32.mxu0 0.0
        %507 = vmatmul.mubr.f32.gmra.mrb[0].mxu0 %v420
        %v508 = vpop.f32.mrb[0].mxu0
        %v509 = vadd.f32 %v440, %v508
        %v510 = vpop.f32.mrb[0].mxu0
        %511 = vmatprep.mubr.f32.mxu0 0.0
        %512 = vmatmul.mubr.f32.gmra.mrb[0].mxu0 %v421
        %v513 = vpop.f32.mrb[0].mxu0
        %v514 = vadd.f32 %v440, %v513
        %v515 = vpop.f32.mrb[0].mxu0
        %516 = vmatprep.mubr.f32.mxu0 0.0
        %517 = vmatmul.mubr.f32.gmra.mrb[0].mxu0 %v422
        %v518 = vpop.f32.mrb[0].mxu0
        %v519 = vadd.f32 %v440, %v518
        %v520 = vpop.f32.mrb[0].mxu0
        %521 = vmatprep.mubr.f32.mxu0 0.0
        %522 = vmatmul.mubr.f32.gmra.mrb[0].mxu0 %v423
        %v523 = vpop.f32.mrb[0].mxu0
        %v524 = vadd.f32 %v440, %v523
        %v525 = vpop.f32.mrb[0].mxu0
        %526 = vmatprep.mubr.f32.mxu0 0.0
        %527 = vmatmul.mubr.f32.gmra.mrb[0].mxu0 %v424
        %v528 = vpop.f32.mrb[0].mxu0
        %v529 = vadd.f32 %v440, %v528
        %v530 = vpop.f32.mrb[0].mxu0
        %531 = vmatprep.mubr.f32.mxu0 0.0
        %532 = vmatmul.mubr.f32.gmra.mrb[0].mxu0 %v425
        %v533 = vpop.f32.mrb[0].mxu0
        %v534 = vadd.f32 %v440, %v533
        %v535 = vpop.f32.mrb[0].mxu0
        %536 = vmatprep.mubr.f32.mxu0 0.0
        %537 = vmatmul.mubr.f32.gmra.mrb[0].mxu0 %v426
        %v538 = vpop.f32.mrb[0].mxu0
        %v539 = vadd.f32 %v440, %v538
        %v540 = vpop.f32.mrb[0].mxu0
        %541 = vmatprep.mubr.f32.mxu0 0.0
        %542 = vmatmul.mubr.f32.gmra.mrb[0].mxu0 %v427
        %v543 = vpop.f32.mrb[0].mxu0
        %v544 = vadd.f32 %v440, %v543
        %v545 = vpop.f32.mrb[0].mxu0
        %546 = vmatprep.mubr.f32.mxu0 0.0
        %547 = vmatmul.mubr.f32.gmra.mrb[0].mxu0 %v428
        %v548 = vpop.f32.mrb[0].mxu0
        %v549 = vadd.f32 %v440, %v548
        %v550 = vpop.f32.mrb[0].mxu0
        %551 = vmatprep.mubr.f32.mxu0 0.0
        %552 = vmatmul.mubr.f32.gmra.mrb[0].mxu0 %v429
        %v553 = vpop.f32.mrb[0].mxu0
        %v554 = vadd.f32 %v440, %v553
        %v555 = vpop.f32.mrb[0].mxu0
        %556 = vmatprep.mubr.f32.mxu0 0.0
        %557 = vmatmul.mubr.f32.gmra.mrb[0].mxu0 %v430
        %v558 = vpop.f32.mrb[0].mxu0
        %v559 = vadd.f32 %v440, %v558
        %v560 = vpop.f32.mrb[0].mxu0
        %561 = vmatprep.mubr.f32.mxu0 0.0
        %562 = vmatmul.mubr.f32.gmra.mrb[0].mxu0 %v431
        %v563 = vpop.f32.mrb[0].mxu0
        %v564 = vadd.f32 %v440, %v563
        %v565 = vpop.f32.mrb[0].mxu0
        %566 = vmatprep.mubr.f32.mxu0 0.0
        %567 = vmatmul.mubr.f32.gmra.mrb[0].mxu0 %v432
        %v568 = vpop.f32.mrb[0].mxu0
        %v569 = vadd.f32 %v440, %v568
        %v570 = vpop.f32.mrb[0].mxu0
        %571 = vmatprep.mubr.f32.mxu0 0.0
        %572 = vmatmul.mubr.f32.gmra.mrb[0].mxu0 %v433
        %v573 = vpop.f32.mrb[0].mxu0
        %v574 = vadd.f32 %v440, %v573
        %v575 = vpop.f32.mrb[0].mxu0
        %576 = vmatprep.mubr.f32.mxu0 0.0
        %577 = vmatmul.mubr.f32.gmra.mrb[0].mxu0 %v434
        %v578 = vpop.f32.mrb[0].mxu0
        %v579 = vadd.f32 %v440, %v578
        %v580 = vpop.f32.mrb[0].mxu0
        %581 = vmatprep.mubr.f32.mxu0 0.0
        %582 = vmatmul.mubr.f32.gmra.mrb[0].mxu0 %v435
        %v583 = vpop.f32.mrb[0].mxu0
        %v584 = vadd.f32 %v440, %v583
        %v585 = vpop.f32.mrb[0].mxu0
        %586 = vdwg.mxu0
        %v587 = vmax.f32 %v509, 0.0
        %v588 = vmax.f32 %v514, 0.0
        %v589 = vmax.f32 %v519, 0.0
        %v590 = vmax.f32 %v524, 0.0
        %v591 = vmax.f32 %v529, 0.0
        %v592 = vmax.f32 %v534, 0.0
        %v593 = vmax.f32 %v539, 0.0
        %v594 = vmax.f32 %v544, 0.0
        %v595 = vmax.f32 %v549, 0.0
        %v596 = vmax.f32 %v554, 0.0
        %v597 = vmax.f32 %v559, 0.0
        %v598 = vmax.f32 %v564, 0.0
        %v599 = vmax.f32 %v569, 0.0
        %v600 = vmax.f32 %v574, 0.0
        %v601 = vmax.f32 %v579, 0.0
        %v602 = vmax.f32 %v584, 0.0
        %s603 = scalar_lea.vmem [#allocation2], 24
        %604 = vst [vmem:[%s603 + $0x1] sm:$0xff] %v587
        %605 = vst [vmem:[%s603 + $0x9] sm:$0xff] %v588
        %606 = vst [vmem:[%s603 + $0x19] sm:$0xff] %v589
        %607 = vst [vmem:[%s603 + $0x21] sm:$0xff] %v590
        %608 = vst [vmem:[%s603 + $0x31] sm:$0xff] %v591
        %609 = vst [vmem:[%s603 + $0x39] sm:$0xff] %v592
        %610 = vst [vmem:[%s603 + $0x49] sm:$0xff] %v593
        %611 = vst [vmem:[%s603 + $0x51] sm:$0xff] %v594
        %612 = vst [vmem:[%s603 + $0x61] sm:$0xff] %v595
        %613 = vst [vmem:[%s603 + $0x69] sm:$0xff] %v596
        %614 = vst [vmem:[%s603 + $0x79] sm:$0xff] %v597
        %615 = vst [vmem:[%s603 + $0x81] sm:$0xff] %v598
        %616 = vst [vmem:[%s603 + $0x91] sm:$0xff] %v599
        %617 = vst [vmem:[%s603 + $0x99] sm:$0xff] %v600
        %618 = vst [vmem:[%s603 + $0xa9] sm:$0xff] %v601
        %619 = vst [vmem:[%s603 + $0xb1] sm:$0xff] %v602
        // Predicated region
        $region85: #{tpu_custom_call.1} parent=39 // pred_check
          %p620 = pneg %p320
        $region86: #{tpu_custom_call.1} parent=39 // pred_check_branch
          %622 = sbr.rel (%p620) target = $region88
        $region87: #{tpu_custom_call.1} parent=39 // pred_region
          %s623 = smul.u32 1, 16
          %s624 = smul.u32 %s623, 1
          %s625 = sshll.u32 %s624, 4
          %626 = dma.done [#allocation4], %s625
          %v627 = vld [vmem:[#allocation3] sm:$0xff]
          %v628 = vld [vmem:[#allocation3 + $0x8] sm:$0xff]
          %629 = vmatprep.subr.mxu0 0.0
          %630 = vmatpush1.msra.mxu0 %v368
          %631 = vmatprep.subr.mxu0 0.0
          %632 = vmatpush1.msra.mxu0 %v369
          %633 = vmatprep.subr.mxu0 0.0
          %634 = vmatpush1.msra.mxu0 %v370
          %635 = vmatprep.subr.mxu0 0.0
          %636 = vmatpush1.msra.mxu0 %v371
          %637 = vmatprep.subr.mxu0 0.0
          %638 = vmatpush1.msra.mxu0 %v372
          %639 = vmatprep.subr.mxu0 0.0
          %640 = vmatpush1.msra.mxu0 %v373
          %641 = vmatprep.subr.mxu0 0.0
          %642 = vmatpush1.msra.mxu0 %v374
          %643 = vmatprep.subr.mxu0 0.0
          %644 = vmatpush1.msra.mxu0 %v375
          %645 = vmatprep.subr.mxu0 0.0
          %646 = vmatpush1.msra.mxu0 %v376
          %647 = vmatprep.subr.mxu0 0.0
          %648 = vmatpush1.msra.mxu0 %v377
          %649 = vmatprep.subr.mxu0 0.0
          %650 = vmatpush1.msra.mxu0 %v378
          %651 = vmatprep.subr.mxu0 0.0
          %652 = vmatpush1.msra.mxu0 %v379
          %653 = vmatprep.subr.mxu0 0.0
          %654 = vmatpush1.msra.mxu0 %v380
          %655 = vmatprep.subr.mxu0 0.0
          %656 = vmatpush1.msra.mxu0 %v381
          %657 = vmatprep.subr.mxu0 0.0
          %658 = vmatpush1.msra.mxu0 %v382
          %659 = vmatprep.subr.mxu0 0.0
          %660 = vmatpush1.msra.mxu0 %v383
          %661 = vmatprep.subr.mxu0 0.0
          %662 = vmatpush1.msra.mxu0 0.0
          %663 = vmatprep.subr.mxu0 0.0
          %664 = vmatpush1.msra.mxu0 0.0
          %665 = vmatprep.subr.mxu0 0.0
          %666 = vmatpush1.msra.mxu0 0.0
          %667 = vmatprep.subr.mxu0 0.0
          %668 = vmatpush1.msra.mxu0 0.0
          %669 = vmatprep.subr.mxu0 0.0
          %670 = vmatpush1.msra.mxu0 0.0
          %671 = vmatprep.subr.mxu0 0.0
          %672 = vmatpush1.msra.mxu0 0.0
          %673 = vmatprep.subr.mxu0 0.0
          %674 = vmatpush1.msra.mxu0 0.0
          %675 = vmatprep.subr.mxu0 0.0
          %676 = vmatpush1.msra.mxu0 0.0
          %677 = vmatprep.subr.mxu0 0.0
          %678 = vmatpush1.msra.mxu0 0.0
          %679 = vmatprep.subr.mxu0 0.0
          %680 = vmatpush1.msra.mxu0 0.0
          %681 = vmatprep.subr.mxu0 0.0
          %682 = vmatpush1.msra.mxu0 0.0
          %683 = vmatprep.subr.mxu0 0.0
          %684 = vmatpush1.msra.mxu0 0.0
          %685 = vmatprep.subr.mxu0 0.0
          %686 = vmatpush1.msra.mxu0 0.0
          %687 = vmatprep.subr.mxu0 0.0
          %688 = vmatpush1.msra.mxu0 0.0
          %689 = vmatprep.subr.mxu0 0.0
          %690 = vmatpush1.msra.mxu0 0.0
          %691 = vmatprep.subr.mxu0 0.0
          %692 = vmatpush1.msra.mxu0 0.0
          %693 = vmatprep.mubr.f32.mxu0 0.0
          %694 = vmatmul.mubr.f32.gmra.mrb[0].mxu0 %v627
          %v695 = vpop.f32.mrb[0].mxu0
          %v696 = vadd.f32 %v440, %v695
          %v697 = vpop.f32.mrb[0].mxu0
          %698 = vmatprep.mubr.f32.mxu0 0.0
          %699 = vmatmul.mubr.f32.gmra.mrb[0].mxu0 %v628
          %v700 = vpop.f32.mrb[0].mxu0
          %v701 = vadd.f32 %v440, %v700
          %v702 = vpop.f32.mrb[0].mxu0
          %703 = vdwg.mxu0
          %v704 = vmax.f32 %v696, 0.0
          %v705 = vmax.f32 %v701, 0.0
          %706 = vst [vmem:[#allocation2 + $0x1] sm:$0xff] %v704
          %707 = vst [vmem:[#allocation2 + $0x9] sm:$0xff] %v705
        $region88: #{tpu_custom_call.1} parent=39 // pred_fallthru
          _
        // Predicated region
        $region89: #{tpu_custom_call.1} parent=39 // pred_check
          %p708 = pneg %p322
        $region90: #{tpu_custom_call.1} parent=39 // pred_check_branch
          %710 = sbr.rel (%p708) target = $region92
        $region91: #{tpu_custom_call.1} parent=39 // pred_region
          %s711 = scalar_lea.vmem [#allocation3], 16
          %s712 = scalar_lea.sflag [#allocation4], 1
          %s713 = smul.u32 1, 16
          %s714 = smul.u32 %s713, 1
          %s715 = sshll.u32 %s714, 4
          %716 = dma.done %s712, %s715
          %v717 = vld [vmem:[%s711] sm:$0xff]
          %v718 = vld [vmem:[%s711 + $0x8] sm:$0xff]
          %719 = vmatprep.subr.mxu0 0.0
          %720 = vmatpush1.msra.mxu0 %v368
          %721 = vmatprep.subr.mxu0 0.0
          %722 = vmatpush1.msra.mxu0 %v369
          %723 = vmatprep.subr.mxu0 0.0
          %724 = vmatpush1.msra.mxu0 %v370
          %725 = vmatprep.subr.mxu0 0.0
          %726 = vmatpush1.msra.mxu0 %v371
          %727 = vmatprep.subr.mxu0 0.0
          %728 = vmatpush1.msra.mxu0 %v372
          %729 = vmatprep.subr.mxu0 0.0
          %730 = vmatpush1.msra.mxu0 %v373
          %731 = vmatprep.subr.mxu0 0.0
          %732 = vmatpush1.msra.mxu0 %v374
          %733 = vmatprep.subr.mxu0 0.0
          %734 = vmatpush1.msra.mxu0 %v375
          %735 = vmatprep.subr.mxu0 0.0
          %736 = vmatpush1.msra.mxu0 %v376
          %737 = vmatprep.subr.mxu0 0.0
          %738 = vmatpush1.msra.mxu0 %v377
          %739 = vmatprep.subr.mxu0 0.0
          %740 = vmatpush1.msra.mxu0 %v378
          %741 = vmatprep.subr.mxu0 0.0
          %742 = vmatpush1.msra.mxu0 %v379
          %743 = vmatprep.subr.mxu0 0.0
          %744 = vmatpush1.msra.mxu0 %v380
          %745 = vmatprep.subr.mxu0 0.0
          %746 = vmatpush1.msra.mxu0 %v381
          %747 = vmatprep.subr.mxu0 0.0
          %748 = vmatpush1.msra.mxu0 %v382
          %749 = vmatprep.subr.mxu0 0.0
          %750 = vmatpush1.msra.mxu0 %v383
          %751 = vmatprep.subr.mxu0 0.0
          %752 = vmatpush1.msra.mxu0 0.0
          %753 = vmatprep.subr.mxu0 0.0
          %754 = vmatpush1.msra.mxu0 0.0
          %755 = vmatprep.subr.mxu0 0.0
          %756 = vmatpush1.msra.mxu0 0.0
          %757 = vmatprep.subr.mxu0 0.0
          %758 = vmatpush1.msra.mxu0 0.0
          %759 = vmatprep.subr.mxu0 0.0
          %760 = vmatpush1.msra.mxu0 0.0
          %761 = vmatprep.subr.mxu0 0.0
          %762 = vmatpush1.msra.mxu0 0.0
          %763 = vmatprep.subr.mxu0 0.0
          %764 = vmatpush1.msra.mxu0 0.0
          %765 = vmatprep.subr.mxu0 0.0
          %766 = vmatpush1.msra.mxu0 0.0
          %767 = vmatprep.subr.mxu0 0.0
          %768 = vmatpush1.msra.mxu0 0.0
          %769 = vmatprep.subr.mxu0 0.0
          %770 = vmatpush1.msra.mxu0 0.0
          %771 = vmatprep.subr.mxu0 0.0
          %772 = vmatpush1.msra.mxu0 0.0
          %773 = vmatprep.subr.mxu0 0.0
          %774 = vmatpush1.msra.mxu0 0.0
          %775 = vmatprep.subr.mxu0 0.0
          %776 = vmatpush1.msra.mxu0 0.0
          %777 = vmatprep.subr.mxu0 0.0
          %778 = vmatpush1.msra.mxu0 0.0
          %779 = vmatprep.subr.mxu0 0.0
          %780 = vmatpush1.msra.mxu0 0.0
          %781 = vmatprep.subr.mxu0 0.0
          %782 = vmatpush1.msra.mxu0 0.0
          %783 = vmatprep.mubr.f32.mxu0 0.0
          %784 = vmatmul.mubr.f32.gmra.mrb[0].mxu0 %v717
          %v785 = vpop.f32.mrb[0].mxu0
          %v786 = vadd.f32 %v440, %v785
          %v787 = vpop.f32.mrb[0].mxu0
          %788 = vmatprep.mubr.f32.mxu0 0.0
          %789 = vmatmul.mubr.f32.gmra.mrb[0].mxu0 %v718
          %v790 = vpop.f32.mrb[0].mxu0
          %v791 = vadd.f32 %v440, %v790
          %v792 = vpop.f32.mrb[0].mxu0
          %793 = vdwg.mxu0
          %v794 = vmax.f32 %v786, 0.0
          %v795 = vmax.f32 %v791, 0.0
          %s796 = scalar_lea.vmem [#allocation2], 216
          %797 = vst [vmem:[%s796 + $0x1] sm:$0xff] %v794
          %798 = vst [vmem:[%s796 + $0x9] sm:$0xff] %v795
        $region92: #{tpu_custom_call.1} parent=39 // pred_fallthru
          _
        %v799 = vld [vmem:[#allocation2] sm:$0xff]
        %v800 = vld [vmem:[#allocation2 + $0x8] sm:$0xff]
        %v801 = vld [vmem:[#allocation2 + $0x18] sm:$0xff]
        %v802 = vld [vmem:[#allocation2 + $0x20] sm:$0xff]
        %v803 = vld [vmem:[#allocation2 + $0x30] sm:$0xff]
        %v804 = vld [vmem:[#allocation2 + $0x38] sm:$0xff]
        %v805 = vld [vmem:[#allocation2 + $0x48] sm:$0xff]
        %v806 = vld [vmem:[#allocation2 + $0x50] sm:$0xff]
        %v807 = vld [vmem:[#allocation2 + $0x60] sm:$0xff]
        %v808 = vld [vmem:[#allocation2 + $0x68] sm:$0xff]
        %v809 = vld [vmem:[#allocation2 + $0x78] sm:$0xff]
        %v810 = vld [vmem:[#allocation2 + $0x80] sm:$0xff]
        %v811 = vld [vmem:[#allocation2 + $0x90] sm:$0xff]
        %v812 = vld [vmem:[#allocation2 + $0x98] sm:$0xff]
        %v813 = vld [vmem:[#allocation2 + $0xa8] sm:$0xff]
        %v814 = vld [vmem:[#allocation2 + $0xb0] sm:$0xff]
        %v815 = vld [vmem:[#allocation2 + $0x1] sm:$0xff]
        %v816 = vld [vmem:[#allocation2 + $0x9] sm:$0xff]
        %v817 = vld [vmem:[#allocation2 + $0x19] sm:$0xff]
        %v818 = vld [vmem:[#allocation2 + $0x21] sm:$0xff]
        %v819 = vld [vmem:[#allocation2 + $0x31] sm:$0xff]
        %v820 = vld [vmem:[#allocation2 + $0x39] sm:$0xff]
        %v821 = vld [vmem:[#allocation2 + $0x49] sm:$0xff]
        %v822 = vld [vmem:[#allocation2 + $0x51] sm:$0xff]
        %v823 = vld [vmem:[#allocation2 + $0x61] sm:$0xff]
        %v824 = vld [vmem:[#allocation2 + $0x69] sm:$0xff]
        %v825 = vld [vmem:[#allocation2 + $0x79] sm:$0xff]
        %v826 = vld [vmem:[#allocation2 + $0x81] sm:$0xff]
        %v827 = vld [vmem:[#allocation2 + $0x91] sm:$0xff]
        %v828 = vld [vmem:[#allocation2 + $0x99] sm:$0xff]
        %v829 = vld [vmem:[#allocation2 + $0xa9] sm:$0xff]
        %v830 = vld [vmem:[#allocation2 + $0xb1] sm:$0xff]
        %v831 = vld [vmem:[#allocation2 + $0x2] sm:$0xff]
        %v832 = vld [vmem:[#allocation2 + $0xa] sm:$0xff]
        %v833 = vld [vmem:[#allocation2 + $0x1a] sm:$0xff]
        %v834 = vld [vmem:[#allocation2 + $0x22] sm:$0xff]
        %v835 = vld [vmem:[#allocation2 + $0x32] sm:$0xff]
        %v836 = vld [vmem:[#allocation2 + $0x3a] sm:$0xff]
        %v837 = vld [vmem:[#allocation2 + $0x4a] sm:$0xff]
        %v838 = vld [vmem:[#allocation2 + $0x52] sm:$0xff]
        %v839 = vld [vmem:[#allocation2 + $0x62] sm:$0xff]
        %v840 = vld [vmem:[#allocation2 + $0x6a] sm:$0xff]
        %v841 = vld [vmem:[#allocation2 + $0x7a] sm:$0xff]
        %v842 = vld [vmem:[#allocation2 + $0x82] sm:$0xff]
        %v843 = vld [vmem:[#allocation2 + $0x92] sm:$0xff]
        %v844 = vld [vmem:[#allocation2 + $0x9a] sm:$0xff]
        %v845 = vld [vmem:[#allocation2 + $0xaa] sm:$0xff]
        %v846 = vld [vmem:[#allocation2 + $0xb2] sm:$0xff]
        %v847 = vld [vmem:[#allocation11] sm:$0xff]
        %v848 = vld [vmem:[#allocation11 + $0x8] sm:$0xff]
        %v849 = vld [vmem:[#allocation11 + $0x10] sm:$0xff]
        %v850 = vld [vmem:[#allocation11 + $0x18] sm:$0xff]
        %v851 = vld [vmem:[#allocation11 + $0x20] sm:$0xff]
        %v852 = vld [vmem:[#allocation11 + $0x28] sm:$0xff]
        %v853 = vld [vmem:[#allocation11 + $0x30] sm:$0xff]
        %v854 = vld [vmem:[#allocation11 + $0x38] sm:$0xff]
        %v855 = vld [vmem:[#allocation11 + $0x40] sm:$0xff]
        %v856 = vld [vmem:[#allocation11 + $0x48] sm:$0xff]
        %v857 = vld [vmem:[#allocation11 + $0x50] sm:$0xff]
        %v858 = vld [vmem:[#allocation11 + $0x58] sm:$0xff]
        %v859 = vld [vmem:[#allocation11 + $0x60] sm:$0xff]
        %v860 = vld [vmem:[#allocation11 + $0x68] sm:$0xff]
        %v861 = vld [vmem:[#allocation11 + $0x70] sm:$0xff]
        %v862 = vld [vmem:[#allocation11 + $0x78] sm:$0xff]
        %v863 = vld [vmem:[#allocation11 + $0x80] sm:$0xff]
        %v864 = vld [vmem:[#allocation11 + $0x88] sm:$0xff]
        %v865 = vld [vmem:[#allocation11 + $0x90] sm:$0xff]
        %v866 = vld [vmem:[#allocation11 + $0x98] sm:$0xff]
        %v867 = vld [vmem:[#allocation11 + $0xa0] sm:$0xff]
        %v868 = vld [vmem:[#allocation11 + $0xa8] sm:$0xff]
        %v869 = vld [vmem:[#allocation11 + $0xb0] sm:$0xff]
        %v870 = vld [vmem:[#allocation11 + $0xb8] sm:$0xff]
        %v871 = vld [vmem:[#allocation11 + $0xc0] sm:$0xff]
        %v872 = vld [vmem:[#allocation11 + $0xc8] sm:$0xff]
        %v873 = vld [vmem:[#allocation11 + $0xd0] sm:$0xff]
        %v874 = vld [vmem:[#allocation11 + $0xd8] sm:$0xff]
        %v875 = vld [vmem:[#allocation11 + $0xe0] sm:$0xff]
        %v876 = vld [vmem:[#allocation11 + $0xe8] sm:$0xff]
        %v877 = vld [vmem:[#allocation11 + $0xf0] sm:$0xff]
        %v878 = vld [vmem:[#allocation11 + $0xf8] sm:$0xff]
        %v879 = vld [vmem:[#allocation11 + $0x100] sm:$0xff]
        %v880 = vld [vmem:[#allocation11 + $0x108] sm:$0xff]
        %v881 = vld [vmem:[#allocation11 + $0x110] sm:$0xff]
        %v882 = vld [vmem:[#allocation11 + $0x118] sm:$0xff]
        %v883 = vld [vmem:[#allocation11 + $0x120] sm:$0xff]
        %v884 = vld [vmem:[#allocation11 + $0x128] sm:$0xff]
        %v885 = vld [vmem:[#allocation11 + $0x130] sm:$0xff]
        %v886 = vld [vmem:[#allocation11 + $0x138] sm:$0xff]
        %v887 = vld [vmem:[#allocation11 + $0x140] sm:$0xff]
        %v888 = vld [vmem:[#allocation11 + $0x148] sm:$0xff]
        %v889 = vld [vmem:[#allocation11 + $0x150] sm:$0xff]
        %v890 = vld [vmem:[#allocation11 + $0x158] sm:$0xff]
        %v891 = vld [vmem:[#allocation11 + $0x160] sm:$0xff]
        %v892 = vld [vmem:[#allocation11 + $0x168] sm:$0xff]
        %v893 = vld [vmem:[#allocation11 + $0x170] sm:$0xff]
        %v894 = vld [vmem:[#allocation11 + $0x178] sm:$0xff]
        %v895 = vld [vmem:[%s603] sm:$0xff]
        %v896 = vld [vmem:[%s603 + $0x8] sm:$0xff]
        %v897 = vld [vmem:[%s603 + $0x18] sm:$0xff]
        %v898 = vld [vmem:[%s603 + $0x20] sm:$0xff]
        %v899 = vld [vmem:[%s603 + $0x30] sm:$0xff]
        %v900 = vld [vmem:[%s603 + $0x38] sm:$0xff]
        %v901 = vld [vmem:[%s603 + $0x48] sm:$0xff]
        %v902 = vld [vmem:[%s603 + $0x50] sm:$0xff]
        %v903 = vld [vmem:[%s603 + $0x60] sm:$0xff]
        %v904 = vld [vmem:[%s603 + $0x68] sm:$0xff]
        %v905 = vld [vmem:[%s603 + $0x78] sm:$0xff]
        %v906 = vld [vmem:[%s603 + $0x80] sm:$0xff]
        %v907 = vld [vmem:[%s603 + $0x90] sm:$0xff]
        %v908 = vld [vmem:[%s603 + $0x98] sm:$0xff]
        %v909 = vld [vmem:[%s603 + $0xa8] sm:$0xff]
        %v910 = vld [vmem:[%s603 + $0xb0] sm:$0xff]
        %v911 = vld [vmem:[%s603 + $0x1] sm:$0xff]
        %v912 = vld [vmem:[%s603 + $0x9] sm:$0xff]
        %v913 = vld [vmem:[%s603 + $0x19] sm:$0xff]
        %v914 = vld [vmem:[%s603 + $0x21] sm:$0xff]
        %v915 = vld [vmem:[%s603 + $0x31] sm:$0xff]
        %v916 = vld [vmem:[%s603 + $0x39] sm:$0xff]
        %v917 = vld [vmem:[%s603 + $0x49] sm:$0xff]
        %v918 = vld [vmem:[%s603 + $0x51] sm:$0xff]
        %v919 = vld [vmem:[%s603 + $0x61] sm:$0xff]
        %v920 = vld [vmem:[%s603 + $0x69] sm:$0xff]
        %v921 = vld [vmem:[%s603 + $0x79] sm:$0xff]
        %v922 = vld [vmem:[%s603 + $0x81] sm:$0xff]
        %v923 = vld [vmem:[%s603 + $0x91] sm:$0xff]
        %v924 = vld [vmem:[%s603 + $0x99] sm:$0xff]
        %v925 = vld [vmem:[%s603 + $0xa9] sm:$0xff]
        %v926 = vld [vmem:[%s603 + $0xb1] sm:$0xff]
        %v927 = vld [vmem:[%s603 + $0x2] sm:$0xff]
        %v928 = vld [vmem:[%s603 + $0xa] sm:$0xff]
        %v929 = vld [vmem:[%s603 + $0x1a] sm:$0xff]
        %v930 = vld [vmem:[%s603 + $0x22] sm:$0xff]
        %v931 = vld [vmem:[%s603 + $0x32] sm:$0xff]
        %v932 = vld [vmem:[%s603 + $0x3a] sm:$0xff]
        %v933 = vld [vmem:[%s603 + $0x4a] sm:$0xff]
        %v934 = vld [vmem:[%s603 + $0x52] sm:$0xff]
        %v935 = vld [vmem:[%s603 + $0x62] sm:$0xff]
        %v936 = vld [vmem:[%s603 + $0x6a] sm:$0xff]
        %v937 = vld [vmem:[%s603 + $0x7a] sm:$0xff]
        %v938 = vld [vmem:[%s603 + $0x82] sm:$0xff]
        %v939 = vld [vmem:[%s603 + $0x92] sm:$0xff]
        %v940 = vld [vmem:[%s603 + $0x9a] sm:$0xff]
        %v941 = vld [vmem:[%s603 + $0xaa] sm:$0xff]
        %v942 = vld [vmem:[%s603 + $0xb2] sm:$0xff]
        %s943 = scalar_lea.vmem [#allocation11], 384
        %v944 = vld [vmem:[%s943] sm:$0xff]
        %v945 = vld [vmem:[%s943 + $0x8] sm:$0xff]
        %v946 = vld [vmem:[%s943 + $0x10] sm:$0xff]
        %v947 = vld [vmem:[%s943 + $0x18] sm:$0xff]
        %v948 = vld [vmem:[%s943 + $0x20] sm:$0xff]
        %v949 = vld [vmem:[%s943 + $0x28] sm:$0xff]
        %v950 = vld [vmem:[%s943 + $0x30] sm:$0xff]
        %v951 = vld [vmem:[%s943 + $0x38] sm:$0xff]
        %v952 = vld [vmem:[%s943 + $0x40] sm:$0xff]
        %v953 = vld [vmem:[%s943 + $0x48] sm:$0xff]
        %v954 = vld [vmem:[%s943 + $0x50] sm:$0xff]
        %v955 = vld [vmem:[%s943 + $0x58] sm:$0xff]
        %v956 = vld [vmem:[%s943 + $0x60] sm:$0xff]
        %v957 = vld [vmem:[%s943 + $0x68] sm:$0xff]
        %v958 = vld [vmem:[%s943 + $0x70] sm:$0xff]
        %v959 = vld [vmem:[%s943 + $0x78] sm:$0xff]
        %v960 = vld [vmem:[%s943 + $0x80] sm:$0xff]
        %v961 = vld [vmem:[%s943 + $0x88] sm:$0xff]
        %v962 = vld [vmem:[%s943 + $0x90] sm:$0xff]
        %v963 = vld [vmem:[%s943 + $0x98] sm:$0xff]
        %v964 = vld [vmem:[%s943 + $0xa0] sm:$0xff]
        %v965 = vld [vmem:[%s943 + $0xa8] sm:$0xff]
        %v966 = vld [vmem:[%s943 + $0xb0] sm:$0xff]
        %v967 = vld [vmem:[%s943 + $0xb8] sm:$0xff]
        %v968 = vld [vmem:[%s943 + $0xc0] sm:$0xff]
        %v969 = vld [vmem:[%s943 + $0xc8] sm:$0xff]
        %v970 = vld [vmem:[%s943 + $0xd0] sm:$0xff]
        %v971 = vld [vmem:[%s943 + $0xd8] sm:$0xff]
        %v972 = vld [vmem:[%s943 + $0xe0] sm:$0xff]
        %v973 = vld [vmem:[%s943 + $0xe8] sm:$0xff]
        %v974 = vld [vmem:[%s943 + $0xf0] sm:$0xff]
        %v975 = vld [vmem:[%s943 + $0xf8] sm:$0xff]
        %v976 = vld [vmem:[%s943 + $0x100] sm:$0xff]
        %v977 = vld [vmem:[%s943 + $0x108] sm:$0xff]
        %v978 = vld [vmem:[%s943 + $0x110] sm:$0xff]
        %v979 = vld [vmem:[%s943 + $0x118] sm:$0xff]
        %v980 = vld [vmem:[%s943 + $0x120] sm:$0xff]
        %v981 = vld [vmem:[%s943 + $0x128] sm:$0xff]
        %v982 = vld [vmem:[%s943 + $0x130] sm:$0xff]
        %v983 = vld [vmem:[%s943 + $0x138] sm:$0xff]
        %v984 = vld [vmem:[%s943 + $0x140] sm:$0xff]
        %v985 = vld [vmem:[%s943 + $0x148] sm:$0xff]
        %v986 = vld [vmem:[%s943 + $0x150] sm:$0xff]
        %v987 = vld [vmem:[%s943 + $0x158] sm:$0xff]
        %v988 = vld [vmem:[%s943 + $0x160] sm:$0xff]
        %v989 = vld [vmem:[%s943 + $0x168] sm:$0xff]
        %v990 = vld [vmem:[%s943 + $0x170] sm:$0xff]
        %v991 = vld [vmem:[%s943 + $0x178] sm:$0xff]
        %992 = vmatprep.subr.mxu0 0.0
        %993 = vmatpush1.msra.mxu0 %v944
        %994 = vmatprep.subr.mxu0 0.0
        %995 = vmatpush1.msra.mxu0 %v945
        %996 = vmatprep.subr.mxu0 0.0
        %997 = vmatpush1.msra.mxu0 %v946
        %998 = vmatprep.subr.mxu0 0.0
        %999 = vmatpush1.msra.mxu0 %v947
        %1000 = vmatprep.subr.mxu0 0.0
        %1001 = vmatpush1.msra.mxu0 %v948
        %1002 = vmatprep.subr.mxu0 0.0
        %1003 = vmatpush1.msra.mxu0 %v949
        %1004 = vmatprep.subr.mxu0 0.0
        %1005 = vmatpush1.msra.mxu0 %v950
        %1006 = vmatprep.subr.mxu0 0.0
        %1007 = vmatpush1.msra.mxu0 %v951
        %1008 = vmatprep.subr.mxu0 0.0
        %1009 = vmatpush1.msra.mxu0 %v952
        %1010 = vmatprep.subr.mxu0 0.0
        %1011 = vmatpush1.msra.mxu0 %v953
        %1012 = vmatprep.subr.mxu0 0.0
        %1013 = vmatpush1.msra.mxu0 %v954
        %1014 = vmatprep.subr.mxu0 0.0
        %1015 = vmatpush1.msra.mxu0 %v955
        %1016 = vmatprep.subr.mxu0 0.0
        %1017 = vmatpush1.msra.mxu0 %v956
        %1018 = vmatprep.subr.mxu0 0.0
        %1019 = vmatpush1.msra.mxu0 %v957
        %1020 = vmatprep.subr.mxu0 0.0
        %1021 = vmatpush1.msra.mxu0 %v958
        %1022 = vmatprep.subr.mxu0 0.0
        %1023 = vmatpush1.msra.mxu0 %v959
        %1024 = vmatprep.subr.mxu0 0.0
        %1025 = vmatpush1.msra.mxu0 %v960
        %1026 = vmatprep.subr.mxu0 0.0
        %1027 = vmatpush1.msra.mxu0 %v961
        %1028 = vmatprep.subr.mxu0 0.0
        %1029 = vmatpush1.msra.mxu0 %v962
        %1030 = vmatprep.subr.mxu0 0.0
        %1031 = vmatpush1.msra.mxu0 %v963
        %1032 = vmatprep.subr.mxu0 0.0
        %1033 = vmatpush1.msra.mxu0 %v964
        %1034 = vmatprep.subr.mxu0 0.0
        %1035 = vmatpush1.msra.mxu0 %v965
        %1036 = vmatprep.subr.mxu0 0.0
        %1037 = vmatpush1.msra.mxu0 %v966
        %1038 = vmatprep.subr.mxu0 0.0
        %1039 = vmatpush1.msra.mxu0 %v967
        %1040 = vmatprep.subr.mxu0 0.0
        %1041 = vmatpush1.msra.mxu0 %v968
        %1042 = vmatprep.subr.mxu0 0.0
        %1043 = vmatpush1.msra.mxu0 %v969
        %1044 = vmatprep.subr.mxu0 0.0
        %1045 = vmatpush1.msra.mxu0 %v970
        %1046 = vmatprep.subr.mxu0 0.0
        %1047 = vmatpush1.msra.mxu0 %v971
        %1048 = vmatprep.subr.mxu0 0.0
        %1049 = vmatpush1.msra.mxu0 %v972
        %1050 = vmatprep.subr.mxu0 0.0
        %1051 = vmatpush1.msra.mxu0 %v973
        %1052 = vmatprep.subr.mxu0 0.0
        %1053 = vmatpush1.msra.mxu0 %v974
        %1054 = vmatprep.subr.mxu0 0.0
        %1055 = vmatpush1.msra.mxu0 %v975
        %1056 = vmatprep.mubr.f32.mxu0 %v911
        %1057 = vmatmul.mubr.f32.gmra.mrb[0].mxu0 %v895
        %v1058 = vpop.f32.mrb[0].mxu0
        %v1059 = vadd.f32 0.0, %v1058
        %v1060 = vpop.f32.mrb[0].mxu0
        %1061 = vmatprep.mubr.f32.mxu0 %v912
        %1062 = vmatmul.mubr.f32.gmra.mrb[0].mxu0 %v896
        %v1063 = vpop.f32.mrb[0].mxu0
        %v1064 = vadd.f32 0.0, %v1063
        %v1065 = vpop.f32.mrb[0].mxu0
        %1066 = vmatprep.mubr.f32.mxu0 %v913
        %1067 = vmatmul.mubr.f32.gmra.mrb[0].mxu0 %v897
        %v1068 = vpop.f32.mrb[0].mxu0
        %v1069 = vadd.f32 0.0, %v1068
        %v1070 = vpop.f32.mrb[0].mxu0
        %1071 = vmatprep.mubr.f32.mxu0 %v914
        %1072 = vmatmul.mubr.f32.gmra.mrb[0].mxu0 %v898
        %v1073 = vpop.f32.mrb[0].mxu0
        %v1074 = vadd.f32 0.0, %v1073
        %v1075 = vpop.f32.mrb[0].mxu0
        %1076 = vmatprep.mubr.f32.mxu0 %v915
        %1077 = vmatmul.mubr.f32.gmra.mrb[0].mxu0 %v899
        %v1078 = vpop.f32.mrb[0].mxu0
        %v1079 = vadd.f32 0.0, %v1078
        %v1080 = vpop.f32.mrb[0].mxu0
        %1081 = vmatprep.mubr.f32.mxu0 %v916
        %1082 = vmatmul.mubr.f32.gmra.mrb[0].mxu0 %v900
        %v1083 = vpop.f32.mrb[0].mxu0
        %v1084 = vadd.f32 0.0, %v1083
        %v1085 = vpop.f32.mrb[0].mxu0
        %1086 = vmatprep.mubr.f32.mxu0 %v917
        %1087 = vmatmul.mubr.f32.gmra.mrb[0].mxu0 %v901
        %v1088 = vpop.f32.mrb[0].mxu0
        %v1089 = vadd.f32 0.0, %v1088
        %v1090 = vpop.f32.mrb[0].mxu0
        %1091 = vmatprep.mubr.f32.mxu0 %v918
        %1092 = vmatmul.mubr.f32.gmra.mrb[0].mxu0 %v902
        %v1093 = vpop.f32.mrb[0].mxu0
        %v1094 = vadd.f32 0.0, %v1093
        %v1095 = vpop.f32.mrb[0].mxu0
        %1096 = vmatprep.mubr.f32.mxu0 %v919
        %1097 = vmatmul.mubr.f32.gmra.mrb[0].mxu0 %v903
        %v1098 = vpop.f32.mrb[0].mxu0
        %v1099 = vadd.f32 0.0, %v1098
        %v1100 = vpop.f32.mrb[0].mxu0
        %1101 = vmatprep.mubr.f32.mxu0 %v920
        %1102 = vmatmul.mubr.f32.gmra.mrb[0].mxu0 %v904
        %v1103 = vpop.f32.mrb[0].mxu0
        %v1104 = vadd.f32 0.0, %v1103
        %v1105 = vpop.f32.mrb[0].mxu0
        %1106 = vmatprep.mubr.f32.mxu0 %v921
        %1107 = vmatmul.mubr.f32.gmra.mrb[0].mxu0 %v905
        %v1108 = vpop.f32.mrb[0].mxu0
        %v1109 = vadd.f32 0.0, %v1108
        %v1110 = vpop.f32.mrb[0].mxu0
        %1111 = vmatprep.mubr.f32.mxu0 %v922
        %1112 = vmatmul.mubr.f32.gmra.mrb[0].mxu0 %v906
        %v1113 = vpop.f32.mrb[0].mxu0
        %v1114 = vadd.f32 0.0, %v1113
        %v1115 = vpop.f32.mrb[0].mxu0
        %1116 = vmatprep.mubr.f32.mxu0 %v923
        %1117 = vmatmul.mubr.f32.gmra.mrb[0].mxu0 %v907
        %v1118 = vpop.f32.mrb[0].mxu0
        %v1119 = vadd.f32 0.0, %v1118
        %v1120 = vpop.f32.mrb[0].mxu0
        %1121 = vmatprep.mubr.f32.mxu0 %v924
        %1122 = vmatmul.mubr.f32.gmra.mrb[0].mxu0 %v908
        %v1123 = vpop.f32.mrb[0].mxu0
        %v1124 = vadd.f32 0.0, %v1123
        %v1125 = vpop.f32.mrb[0].mxu0
        %1126 = vmatprep.mubr.f32.mxu0 %v925
        %1127 = vmatmul.mubr.f32.gmra.mrb[0].mxu0 %v909
        %v1128 = vpop.f32.mrb[0].mxu0
        %v1129 = vadd.f32 0.0, %v1128
        %v1130 = vpop.f32.mrb[0].mxu0
        %1131 = vmatprep.mubr.f32.mxu0 %v926
        %1132 = vmatmul.mubr.f32.gmra.mrb[0].mxu0 %v910
        %v1133 = vpop.f32.mrb[0].mxu0
        %v1134 = vadd.f32 0.0, %v1133
        %v1135 = vpop.f32.mrb[0].mxu0
        %1136 = vdwg.mxu0
        %1137 = vmatprep.subr.mxu0 0.0
        %1138 = vmatpush1.msra.mxu0 %v976
        %1139 = vmatprep.subr.mxu0 0.0
        %1140 = vmatpush1.msra.mxu0 %v977
        %1141 = vmatprep.subr.mxu0 0.0
        %1142 = vmatpush1.msra.mxu0 %v978
        %1143 = vmatprep.subr.mxu0 0.0
        %1144 = vmatpush1.msra.mxu0 %v979
        %1145 = vmatprep.subr.mxu0 0.0
        %1146 = vmatpush1.msra.mxu0 %v980
        %1147 = vmatprep.subr.mxu0 0.0
        %1148 = vmatpush1.msra.mxu0 %v981
        %1149 = vmatprep.subr.mxu0 0.0
        %1150 = vmatpush1.msra.mxu0 %v982
        %1151 = vmatprep.subr.mxu0 0.0
        %1152 = vmatpush1.msra.mxu0 %v983
        %1153 = vmatprep.subr.mxu0 0.0
        %1154 = vmatpush1.msra.mxu0 %v984
        %1155 = vmatprep.subr.mxu0 0.0
        %1156 = vmatpush1.msra.mxu0 %v985
        %1157 = vmatprep.subr.mxu0 0.0
        %1158 = vmatpush1.msra.mxu0 %v986
        %1159 = vmatprep.subr.mxu0 0.0
        %1160 = vmatpush1.msra.mxu0 %v987
        %1161 = vmatprep.subr.mxu0 0.0
        %1162 = vmatpush1.msra.mxu0 %v988
        %1163 = vmatprep.subr.mxu0 0.0
        %1164 = vmatpush1.msra.mxu0 %v989
        %1165 = vmatprep.subr.mxu0 0.0
        %1166 = vmatpush1.msra.mxu0 %v990
        %1167 = vmatprep.subr.mxu0 0.0
        %1168 = vmatpush1.msra.mxu0 %v991
        %1169 = vmatprep.subr.mxu0 0.0
        %1170 = vmatpush1.msra.mxu0 0.0
        %1171 = vmatprep.subr.mxu0 0.0
        %1172 = vmatpush1.msra.mxu0 0.0
        %1173 = vmatprep.subr.mxu0 0.0
        %1174 = vmatpush1.msra.mxu0 0.0
        %1175 = vmatprep.subr.mxu0 0.0
        %1176 = vmatpush1.msra.mxu0 0.0
        %1177 = vmatprep.subr.mxu0 0.0
        %1178 = vmatpush1.msra.mxu0 0.0
        %1179 = vmatprep.subr.mxu0 0.0
        %1180 = vmatpush1.msra.mxu0 0.0
        %1181 = vmatprep.subr.mxu0 0.0
        %1182 = vmatpush1.msra.mxu0 0.0
        %1183 = vmatprep.subr.mxu0 0.0
        %1184 = vmatpush1.msra.mxu0 0.0
        %1185 = vmatprep.subr.mxu0 0.0
        %1186 = vmatpush1.msra.mxu0 0.0
        %1187 = vmatprep.subr.mxu0 0.0
        %1188 = vmatpush1.msra.mxu0 0.0
        %1189 = vmatprep.subr.mxu0 0.0
        %1190 = vmatpush1.msra.mxu0 0.0
        %1191 = vmatprep.subr.mxu0 0.0
        %1192 = vmatpush1.msra.mxu0 0.0
        %1193 = vmatprep.subr.mxu0 0.0
        %1194 = vmatpush1.msra.mxu0 0.0
        %1195 = vmatprep.subr.mxu0 0.0
        %1196 = vmatpush1.msra.mxu0 0.0
        %1197 = vmatprep.subr.mxu0 0.0
        %1198 = vmatpush1.msra.mxu0 0.0
        %1199 = vmatprep.subr.mxu0 0.0
        %1200 = vmatpush1.msra.mxu0 0.0
        %1201 = vmatprep.mubr.f32.mxu0 0.0
        %1202 = vmatmul.mubr.f32.gmra.mrb[0].mxu0 %v927
        %v1203 = vpop.f32.mrb[0].mxu0
        %v1204 = vadd.f32 %v1059, %v1203
        %v1205 = vpop.f32.mrb[0].mxu0
        %1206 = vmatprep.mubr.f32.mxu0 0.0
        %1207 = vmatmul.mubr.f32.gmra.mrb[0].mxu0 %v928
        %v1208 = vpop.f32.mrb[0].mxu0
        %v1209 = vadd.f32 %v1064, %v1208
        %v1210 = vpop.f32.mrb[0].mxu0
        %1211 = vmatprep.mubr.f32.mxu0 0.0
        %1212 = vmatmul.mubr.f32.gmra.mrb[0].mxu0 %v929
        %v1213 = vpop.f32.mrb[0].mxu0
        %v1214 = vadd.f32 %v1069, %v1213
        %v1215 = vpop.f32.mrb[0].mxu0
        %1216 = vmatprep.mubr.f32.mxu0 0.0
        %1217 = vmatmul.mubr.f32.gmra.mrb[0].mxu0 %v930
        %v1218 = vpop.f32.mrb[0].mxu0
        %v1219 = vadd.f32 %v1074, %v1218
        %v1220 = vpop.f32.mrb[0].mxu0
        %1221 = vmatprep.mubr.f32.mxu0 0.0
        %1222 = vmatmul.mubr.f32.gmra.mrb[0].mxu0 %v931
        %v1223 = vpop.f32.mrb[0].mxu0
        %v1224 = vadd.f32 %v1079, %v1223
        %v1225 = vpop.f32.mrb[0].mxu0
        %1226 = vmatprep.mubr.f32.mxu0 0.0
        %1227 = vmatmul.mubr.f32.gmra.mrb[0].mxu0 %v932
        %v1228 = vpop.f32.mrb[0].mxu0
        %v1229 = vadd.f32 %v1084, %v1228
        %v1230 = vpop.f32.mrb[0].mxu0
        %1231 = vmatprep.mubr.f32.mxu0 0.0
        %1232 = vmatmul.mubr.f32.gmra.mrb[0].mxu0 %v933
        %v1233 = vpop.f32.mrb[0].mxu0
        %v1234 = vadd.f32 %v1089, %v1233
        %v1235 = vpop.f32.mrb[0].mxu0
        %1236 = vmatprep.mubr.f32.mxu0 0.0
        %1237 = vmatmul.mubr.f32.gmra.mrb[0].mxu0 %v934
        %v1238 = vpop.f32.mrb[0].mxu0
        %v1239 = vadd.f32 %v1094, %v1238
        %v1240 = vpop.f32.mrb[0].mxu0
        %1241 = vmatprep.mubr.f32.mxu0 0.0
        %1242 = vmatmul.mubr.f32.gmra.mrb[0].mxu0 %v935
        %v1243 = vpop.f32.mrb[0].mxu0
        %v1244 = vadd.f32 %v1099, %v1243
        %v1245 = vpop.f32.mrb[0].mxu0
        %1246 = vmatprep.mubr.f32.mxu0 0.0
        %1247 = vmatmul.mubr.f32.gmra.mrb[0].mxu0 %v936
        %v1248 = vpop.f32.mrb[0].mxu0
        %v1249 = vadd.f32 %v1104, %v1248
        %v1250 = vpop.f32.mrb[0].mxu0
        %1251 = vmatprep.mubr.f32.mxu0 0.0
        %1252 = vmatmul.mubr.f32.gmra.mrb[0].mxu0 %v937
        %v1253 = vpop.f32.mrb[0].mxu0
        %v1254 = vadd.f32 %v1109, %v1253
        %v1255 = vpop.f32.mrb[0].mxu0
        %1256 = vmatprep.mubr.f32.mxu0 0.0
        %1257 = vmatmul.mubr.f32.gmra.mrb[0].mxu0 %v938
        %v1258 = vpop.f32.mrb[0].mxu0
        %v1259 = vadd.f32 %v1114, %v1258
        %v1260 = vpop.f32.mrb[0].mxu0
        %1261 = vmatprep.mubr.f32.mxu0 0.0
        %1262 = vmatmul.mubr.f32.gmra.mrb[0].mxu0 %v939
        %v1263 = vpop.f32.mrb[0].mxu0
        %v1264 = vadd.f32 %v1119, %v1263
        %v1265 = vpop.f32.mrb[0].mxu0
        %1266 = vmatprep.mubr.f32.mxu0 0.0
        %1267 = vmatmul.mubr.f32.gmra.mrb[0].mxu0 %v940
        %v1268 = vpop.f32.mrb[0].mxu0
        %v1269 = vadd.f32 %v1124, %v1268
        %v1270 = vpop.f32.mrb[0].mxu0
        %1271 = vmatprep.mubr.f32.mxu0 0.0
        %1272 = vmatmul.mubr.f32.gmra.mrb[0].mxu0 %v941
        %v1273 = vpop.f32.mrb[0].mxu0
        %v1274 = vadd.f32 %v1129, %v1273
        %v1275 = vpop.f32.mrb[0].mxu0
        %1276 = vmatprep.mubr.f32.mxu0 0.0
        %1277 = vmatmul.mubr.f32.gmra.mrb[0].mxu0 %v942
        %v1278 = vpop.f32.mrb[0].mxu0
        %v1279 = vadd.f32 %v1134, %v1278
        %v1280 = vpop.f32.mrb[0].mxu0
        %1281 = vdwg.mxu0
        %1282 = vmatprep.subr.mxu0 0.0
        %1283 = vmatpush1.msra.mxu0 %v847
        %1284 = vmatprep.subr.mxu0 0.0
        %1285 = vmatpush1.msra.mxu0 %v848
        %1286 = vmatprep.subr.mxu0 0.0
        %1287 = vmatpush1.msra.mxu0 %v849
        %1288 = vmatprep.subr.mxu0 0.0
        %1289 = vmatpush1.msra.mxu0 %v850
        %1290 = vmatprep.subr.mxu0 0.0
        %1291 = vmatpush1.msra.mxu0 %v851
        %1292 = vmatprep.subr.mxu0 0.0
        %1293 = vmatpush1.msra.mxu0 %v852
        %1294 = vmatprep.subr.mxu0 0.0
        %1295 = vmatpush1.msra.mxu0 %v853
        %1296 = vmatprep.subr.mxu0 0.0
        %1297 = vmatpush1.msra.mxu0 %v854
        %1298 = vmatprep.subr.mxu0 0.0
        %1299 = vmatpush1.msra.mxu0 %v855
        %1300 = vmatprep.subr.mxu0 0.0
        %1301 = vmatpush1.msra.mxu0 %v856
        %1302 = vmatprep.subr.mxu0 0.0
        %1303 = vmatpush1.msra.mxu0 %v857
        %1304 = vmatprep.subr.mxu0 0.0
        %1305 = vmatpush1.msra.mxu0 %v858
        %1306 = vmatprep.subr.mxu0 0.0
        %1307 = vmatpush1.msra.mxu0 %v859
        %1308 = vmatprep.subr.mxu0 0.0
        %1309 = vmatpush1.msra.mxu0 %v860
        %1310 = vmatprep.subr.mxu0 0.0
        %1311 = vmatpush1.msra.mxu0 %v861
        %1312 = vmatprep.subr.mxu0 0.0
        %1313 = vmatpush1.msra.mxu0 %v862
        %1314 = vmatprep.subr.mxu0 0.0
        %1315 = vmatpush1.msra.mxu0 %v863
        %1316 = vmatprep.subr.mxu0 0.0
        %1317 = vmatpush1.msra.mxu0 %v864
        %1318 = vmatprep.subr.mxu0 0.0
        %1319 = vmatpush1.msra.mxu0 %v865
        %1320 = vmatprep.subr.mxu0 0.0
        %1321 = vmatpush1.msra.mxu0 %v866
        %1322 = vmatprep.subr.mxu0 0.0
        %1323 = vmatpush1.msra.mxu0 %v867
        %1324 = vmatprep.subr.mxu0 0.0
        %1325 = vmatpush1.msra.mxu0 %v868
        %1326 = vmatprep.subr.mxu0 0.0
        %1327 = vmatpush1.msra.mxu0 %v869
        %1328 = vmatprep.subr.mxu0 0.0
        %1329 = vmatpush1.msra.mxu0 %v870
        %1330 = vmatprep.subr.mxu0 0.0
        %1331 = vmatpush1.msra.mxu0 %v871
        %1332 = vmatprep.subr.mxu0 0.0
        %1333 = vmatpush1.msra.mxu0 %v872
        %1334 = vmatprep.subr.mxu0 0.0
        %1335 = vmatpush1.msra.mxu0 %v873
        %1336 = vmatprep.subr.mxu0 0.0
        %1337 = vmatpush1.msra.mxu0 %v874
        %1338 = vmatprep.subr.mxu0 0.0
        %1339 = vmatpush1.msra.mxu0 %v875
        %1340 = vmatprep.subr.mxu0 0.0
        %1341 = vmatpush1.msra.mxu0 %v876
        %1342 = vmatprep.subr.mxu0 0.0
        %1343 = vmatpush1.msra.mxu0 %v877
        %1344 = vmatprep.subr.mxu0 0.0
        %1345 = vmatpush1.msra.mxu0 %v878
        %1346 = vmatprep.mubr.f32.mxu0 %v815
        %1347 = vmatmul.mubr.f32.gmra.mrb[0].mxu0 %v799
        %v1348 = vpop.f32.mrb[0].mxu0
        %v1349 = vadd.f32 %v1204, %v1348
        %v1350 = vpop.f32.mrb[0].mxu0
        %1351 = vmatprep.mubr.f32.mxu0 %v816
        %1352 = vmatmul.mubr.f32.gmra.mrb[0].mxu0 %v800
        %v1353 = vpop.f32.mrb[0].mxu0
        %v1354 = vadd.f32 %v1209, %v1353
        %v1355 = vpop.f32.mrb[0].mxu0
        %1356 = vmatprep.mubr.f32.mxu0 %v817
        %1357 = vmatmul.mubr.f32.gmra.mrb[0].mxu0 %v801
        %v1358 = vpop.f32.mrb[0].mxu0
        %v1359 = vadd.f32 %v1214, %v1358
        %v1360 = vpop.f32.mrb[0].mxu0
        %1361 = vmatprep.mubr.f32.mxu0 %v818
        %1362 = vmatmul.mubr.f32.gmra.mrb[0].mxu0 %v802
        %v1363 = vpop.f32.mrb[0].mxu0
        %v1364 = vadd.f32 %v1219, %v1363
        %v1365 = vpop.f32.mrb[0].mxu0
        %1366 = vmatprep.mubr.f32.mxu0 %v819
        %1367 = vmatmul.mubr.f32.gmra.mrb[0].mxu0 %v803
        %v1368 = vpop.f32.mrb[0].mxu0
        %v1369 = vadd.f32 %v1224, %v1368
        %v1370 = vpop.f32.mrb[0].mxu0
        %1371 = vmatprep.mubr.f32.mxu0 %v820
        %1372 = vmatmul.mubr.f32.gmra.mrb[0].mxu0 %v804
        %v1373 = vpop.f32.mrb[0].mxu0
        %v1374 = vadd.f32 %v1229, %v1373
        %v1375 = vpop.f32.mrb[0].mxu0
        %1376 = vmatprep.mubr.f32.mxu0 %v821
        %1377 = vmatmul.mubr.f32.gmra.mrb[0].mxu0 %v805
        %v1378 = vpop.f32.mrb[0].mxu0
        %v1379 = vadd.f32 %v1234, %v1378
        %v1380 = vpop.f32.mrb[0].mxu0
        %1381 = vmatprep.mubr.f32.mxu0 %v822
        %1382 = vmatmul.mubr.f32.gmra.mrb[0].mxu0 %v806
        %v1383 = vpop.f32.mrb[0].mxu0
        %v1384 = vadd.f32 %v1239, %v1383
        %v1385 = vpop.f32.mrb[0].mxu0
        %1386 = vmatprep.mubr.f32.mxu0 %v823
        %1387 = vmatmul.mubr.f32.gmra.mrb[0].mxu0 %v807
        %v1388 = vpop.f32.mrb[0].mxu0
        %v1389 = vadd.f32 %v1244, %v1388
        %v1390 = vpop.f32.mrb[0].mxu0
        %1391 = vmatprep.mubr.f32.mxu0 %v824
        %1392 = vmatmul.mubr.f32.gmra.mrb[0].mxu0 %v808
        %v1393 = vpop.f32.mrb[0].mxu0
        %v1394 = vadd.f32 %v1249, %v1393
        %v1395 = vpop.f32.mrb[0].mxu0
        %1396 = vmatprep.mubr.f32.mxu0 %v825
        %1397 = vmatmul.mubr.f32.gmra.mrb[0].mxu0 %v809
        %v1398 = vpop.f32.mrb[0].mxu0
        %v1399 = vadd.f32 %v1254, %v1398
        %v1400 = vpop.f32.mrb[0].mxu0
        %1401 = vmatprep.mubr.f32.mxu0 %v826
        %1402 = vmatmul.mubr.f32.gmra.mrb[0].mxu0 %v810
        %v1403 = vpop.f32.mrb[0].mxu0
        %v1404 = vadd.f32 %v1259, %v1403
        %v1405 = vpop.f32.mrb[0].mxu0
        %1406 = vmatprep.mubr.f32.mxu0 %v827
        %1407 = vmatmul.mubr.f32.gmra.mrb[0].mxu0 %v811
        %v1408 = vpop.f32.mrb[0].mxu0
        %v1409 = vadd.f32 %v1264, %v1408
        %v1410 = vpop.f32.mrb[0].mxu0
        %1411 = vmatprep.mubr.f32.mxu0 %v828
        %1412 = vmatmul.mubr.f32.gmra.mrb[0].mxu0 %v812
        %v1413 = vpop.f32.mrb[0].mxu0
        %v1414 = vadd.f32 %v1269, %v1413
        %v1415 = vpop.f32.mrb[0].mxu0
        %1416 = vmatprep.mubr.f32.mxu0 %v829
        %1417 = vmatmul.mubr.f32.gmra.mrb[0].mxu0 %v813
        %v1418 = vpop.f32.mrb[0].mxu0
        %v1419 = vadd.f32 %v1274, %v1418
        %v1420 = vpop.f32.mrb[0].mxu0
        %1421 = vmatprep.mubr.f32.mxu0 %v830
        %1422 = vmatmul.mubr.f32.gmra.mrb[0].mxu0 %v814
        %v1423 = vpop.f32.mrb[0].mxu0
        %v1424 = vadd.f32 %v1279, %v1423
        %v1425 = vpop.f32.mrb[0].mxu0
        %1426 = vdwg.mxu0
        %1427 = vmatprep.subr.mxu0 0.0
        %1428 = vmatpush1.msra.mxu0 %v879
        %1429 = vmatprep.subr.mxu0 0.0
        %1430 = vmatpush1.msra.mxu0 %v880
        %1431 = vmatprep.subr.mxu0 0.0
        %1432 = vmatpush1.msra.mxu0 %v881
        %1433 = vmatprep.subr.mxu0 0.0
        %1434 = vmatpush1.msra.mxu0 %v882
        %1435 = vmatprep.subr.mxu0 0.0
        %1436 = vmatpush1.msra.mxu0 %v883
        %1437 = vmatprep.subr.mxu0 0.0
        %1438 = vmatpush1.msra.mxu0 %v884
        %1439 = vmatprep.subr.mxu0 0.0
        %1440 = vmatpush1.msra.mxu0 %v885
        %1441 = vmatprep.subr.mxu0 0.0
        %1442 = vmatpush1.msra.mxu0 %v886
        %1443 = vmatprep.subr.mxu0 0.0
        %1444 = vmatpush1.msra.mxu0 %v887
        %1445 = vmatprep.subr.mxu0 0.0
        %1446 = vmatpush1.msra.mxu0 %v888
        %1447 = vmatprep.subr.mxu0 0.0
        %1448 = vmatpush1.msra.mxu0 %v889
        %1449 = vmatprep.subr.mxu0 0.0
        %1450 = vmatpush1.msra.mxu0 %v890
        %1451 = vmatprep.subr.mxu0 0.0
        %1452 = vmatpush1.msra.mxu0 %v891
        %1453 = vmatprep.subr.mxu0 0.0
        %1454 = vmatpush1.msra.mxu0 %v892
        %1455 = vmatprep.subr.mxu0 0.0
        %1456 = vmatpush1.msra.mxu0 %v893
        %1457 = vmatprep.subr.mxu0 0.0
        %1458 = vmatpush1.msra.mxu0 %v894
        %1459 = vmatprep.subr.mxu0 0.0
        %1460 = vmatpush1.msra.mxu0 0.0
        %1461 = vmatprep.subr.mxu0 0.0
        %1462 = vmatpush1.msra.mxu0 0.0
        %1463 = vmatprep.subr.mxu0 0.0
        %1464 = vmatpush1.msra.mxu0 0.0
        %1465 = vmatprep.subr.mxu0 0.0
        %1466 = vmatpush1.msra.mxu0 0.0
        %1467 = vmatprep.subr.mxu0 0.0
        %1468 = vmatpush1.msra.mxu0 0.0
        %1469 = vmatprep.subr.mxu0 0.0
        %1470 = vmatpush1.msra.mxu0 0.0
        %1471 = vmatprep.subr.mxu0 0.0
        %1472 = vmatpush1.msra.mxu0 0.0
        %1473 = vmatprep.subr.mxu0 0.0
        %1474 = vmatpush1.msra.mxu0 0.0
        %1475 = vmatprep.subr.mxu0 0.0
        %1476 = vmatpush1.msra.mxu0 0.0
        %1477 = vmatprep.subr.mxu0 0.0
        %1478 = vmatpush1.msra.mxu0 0.0
        %1479 = vmatprep.subr.mxu0 0.0
        %1480 = vmatpush1.msra.mxu0 0.0
        %1481 = vmatprep.subr.mxu0 0.0
        %1482 = vmatpush1.msra.mxu0 0.0
        %1483 = vmatprep.subr.mxu0 0.0
        %1484 = vmatpush1.msra.mxu0 0.0
        %1485 = vmatprep.subr.mxu0 0.0
        %1486 = vmatpush1.msra.mxu0 0.0
        %1487 = vmatprep.subr.mxu0 0.0
        %1488 = vmatpush1.msra.mxu0 0.0
        %1489 = vmatprep.subr.mxu0 0.0
        %1490 = vmatpush1.msra.mxu0 0.0
        %1491 = vmatprep.mubr.f32.mxu0 0.0
        %1492 = vmatmul.mubr.f32.gmra.mrb[0].mxu0 %v831
        %v1493 = vpop.f32.mrb[0].mxu0
        %v1494 = vadd.f32 %v1349, %v1493
        %v1495 = vpop.f32.mrb[0].mxu0
        %1496 = vmatprep.mubr.f32.mxu0 0.0
        %1497 = vmatmul.mubr.f32.gmra.mrb[0].mxu0 %v832
        %v1498 = vpop.f32.mrb[0].mxu0
        %v1499 = vadd.f32 %v1354, %v1498
        %v1500 = vpop.f32.mrb[0].mxu0
        %1501 = vmatprep.mubr.f32.mxu0 0.0
        %1502 = vmatmul.mubr.f32.gmra.mrb[0].mxu0 %v833
        %v1503 = vpop.f32.mrb[0].mxu0
        %v1504 = vadd.f32 %v1359, %v1503
        %v1505 = vpop.f32.mrb[0].mxu0
        %1506 = vmatprep.mubr.f32.mxu0 0.0
        %1507 = vmatmul.mubr.f32.gmra.mrb[0].mxu0 %v834
        %v1508 = vpop.f32.mrb[0].mxu0
        %v1509 = vadd.f32 %v1364, %v1508
        %v1510 = vpop.f32.mrb[0].mxu0
        %1511 = vmatprep.mubr.f32.mxu0 0.0
        %1512 = vmatmul.mubr.f32.gmra.mrb[0].mxu0 %v835
        %v1513 = vpop.f32.mrb[0].mxu0
        %v1514 = vadd.f32 %v1369, %v1513
        %v1515 = vpop.f32.mrb[0].mxu0
        %1516 = vmatprep.mubr.f32.mxu0 0.0
        %1517 = vmatmul.mubr.f32.gmra.mrb[0].mxu0 %v836
        %v1518 = vpop.f32.mrb[0].mxu0
        %v1519 = vadd.f32 %v1374, %v1518
        %v1520 = vpop.f32.mrb[0].mxu0
        %1521 = vmatprep.mubr.f32.mxu0 0.0
        %1522 = vmatmul.mubr.f32.gmra.mrb[0].mxu0 %v837
        %v1523 = vpop.f32.mrb[0].mxu0
        %v1524 = vadd.f32 %v1379, %v1523
        %v1525 = vpop.f32.mrb[0].mxu0
        %1526 = vmatprep.mubr.f32.mxu0 0.0
        %1527 = vmatmul.mubr.f32.gmra.mrb[0].mxu0 %v838
        %v1528 = vpop.f32.mrb[0].mxu0
        %v1529 = vadd.f32 %v1384, %v1528
        %v1530 = vpop.f32.mrb[0].mxu0
        %1531 = vmatprep.mubr.f32.mxu0 0.0
        %1532 = vmatmul.mubr.f32.gmra.mrb[0].mxu0 %v839
        %v1533 = vpop.f32.mrb[0].mxu0
        %v1534 = vadd.f32 %v1389, %v1533
        %v1535 = vpop.f32.mrb[0].mxu0
        %1536 = vmatprep.mubr.f32.mxu0 0.0
        %1537 = vmatmul.mubr.f32.gmra.mrb[0].mxu0 %v840
        %v1538 = vpop.f32.mrb[0].mxu0
        %v1539 = vadd.f32 %v1394, %v1538
        %v1540 = vpop.f32.mrb[0].mxu0
        %1541 = vmatprep.mubr.f32.mxu0 0.0
        %1542 = vmatmul.mubr.f32.gmra.mrb[0].mxu0 %v841
        %v1543 = vpop.f32.mrb[0].mxu0
        %v1544 = vadd.f32 %v1399, %v1543
        %v1545 = vpop.f32.mrb[0].mxu0
        %1546 = vmatprep.mubr.f32.mxu0 0.0
        %1547 = vmatmul.mubr.f32.gmra.mrb[0].mxu0 %v842
        %v1548 = vpop.f32.mrb[0].mxu0
        %v1549 = vadd.f32 %v1404, %v1548
        %v1550 = vpop.f32.mrb[0].mxu0
        %1551 = vmatprep.mubr.f32.mxu0 0.0
        %1552 = vmatmul.mubr.f32.gmra.mrb[0].mxu0 %v843
        %v1553 = vpop.f32.mrb[0].mxu0
        %v1554 = vadd.f32 %v1409, %v1553
        %v1555 = vpop.f32.mrb[0].mxu0
        %1556 = vmatprep.mubr.f32.mxu0 0.0
        %1557 = vmatmul.mubr.f32.gmra.mrb[0].mxu0 %v844
        %v1558 = vpop.f32.mrb[0].mxu0
        %v1559 = vadd.f32 %v1414, %v1558
        %v1560 = vpop.f32.mrb[0].mxu0
        %1561 = vmatprep.mubr.f32.mxu0 0.0
        %1562 = vmatmul.mubr.f32.gmra.mrb[0].mxu0 %v845
        %v1563 = vpop.f32.mrb[0].mxu0
        %v1564 = vadd.f32 %v1419, %v1563
        %v1565 = vpop.f32.mrb[0].mxu0
        %1566 = vmatprep.mubr.f32.mxu0 0.0
        %1567 = vmatmul.mubr.f32.gmra.mrb[0].mxu0 %v846
        %v1568 = vpop.f32.mrb[0].mxu0
        %v1569 = vadd.f32 %v1424, %v1568
        %v1570 = vpop.f32.mrb[0].mxu0
        %1571 = vdwg.mxu0
        %s1572 = scalar_lea.vmem [#allocation2], 48
        %v1573 = vld [vmem:[%s1572] sm:$0xff]
        %v1574 = vld [vmem:[%s1572 + $0x8] sm:$0xff]
        %v1575 = vld [vmem:[%s1572 + $0x18] sm:$0xff]
        %v1576 = vld [vmem:[%s1572 + $0x20] sm:$0xff]
        %v1577 = vld [vmem:[%s1572 + $0x30] sm:$0xff]
        %v1578 = vld [vmem:[%s1572 + $0x38] sm:$0xff]
        %v1579 = vld [vmem:[%s1572 + $0x48] sm:$0xff]
        %v1580 = vld [vmem:[%s1572 + $0x50] sm:$0xff]
        %v1581 = vld [vmem:[%s1572 + $0x60] sm:$0xff]
        %v1582 = vld [vmem:[%s1572 + $0x68] sm:$0xff]
        %v1583 = vld [vmem:[%s1572 + $0x78] sm:$0xff]
        %v1584 = vld [vmem:[%s1572 + $0x80] sm:$0xff]
        %v1585 = vld [vmem:[%s1572 + $0x90] sm:$0xff]
        %v1586 = vld [vmem:[%s1572 + $0x98] sm:$0xff]
        %v1587 = vld [vmem:[%s1572 + $0xa8] sm:$0xff]
        %v1588 = vld [vmem:[%s1572 + $0xb0] sm:$0xff]
        %v1589 = vld [vmem:[%s1572 + $0x1] sm:$0xff]
        %v1590 = vld [vmem:[%s1572 + $0x9] sm:$0xff]
        %v1591 = vld [vmem:[%s1572 + $0x19] sm:$0xff]
        %v1592 = vld [vmem:[%s1572 + $0x21] sm:$0xff]
        %v1593 = vld [vmem:[%s1572 + $0x31] sm:$0xff]
        %v1594 = vld [vmem:[%s1572 + $0x39] sm:$0xff]
        %v1595 = vld [vmem:[%s1572 + $0x49] sm:$0xff]
        %v1596 = vld [vmem:[%s1572 + $0x51] sm:$0xff]
        %v1597 = vld [vmem:[%s1572 + $0x61] sm:$0xff]
        %v1598 = vld [vmem:[%s1572 + $0x69] sm:$0xff]
        %v1599 = vld [vmem:[%s1572 + $0x79] sm:$0xff]
        %v1600 = vld [vmem:[%s1572 + $0x81] sm:$0xff]
        %v1601 = vld [vmem:[%s1572 + $0x91] sm:$0xff]
        %v1602 = vld [vmem:[%s1572 + $0x99] sm:$0xff]
        %v1603 = vld [vmem:[%s1572 + $0xa9] sm:$0xff]
        %v1604 = vld [vmem:[%s1572 + $0xb1] sm:$0xff]
        %v1605 = vld [vmem:[%s1572 + $0x2] sm:$0xff]
        %v1606 = vld [vmem:[%s1572 + $0xa] sm:$0xff]
        %v1607 = vld [vmem:[%s1572 + $0x1a] sm:$0xff]
        %v1608 = vld [vmem:[%s1572 + $0x22] sm:$0xff]
        %v1609 = vld [vmem:[%s1572 + $0x32] sm:$0xff]
        %v1610 = vld [vmem:[%s1572 + $0x3a] sm:$0xff]
        %v1611 = vld [vmem:[%s1572 + $0x4a] sm:$0xff]
        %v1612 = vld [vmem:[%s1572 + $0x52] sm:$0xff]
        %v1613 = vld [vmem:[%s1572 + $0x62] sm:$0xff]
        %v1614 = vld [vmem:[%s1572 + $0x6a] sm:$0xff]
        %v1615 = vld [vmem:[%s1572 + $0x7a] sm:$0xff]
        %v1616 = vld [vmem:[%s1572 + $0x82] sm:$0xff]
        %v1617 = vld [vmem:[%s1572 + $0x92] sm:$0xff]
        %v1618 = vld [vmem:[%s1572 + $0x9a] sm:$0xff]
        %v1619 = vld [vmem:[%s1572 + $0xaa] sm:$0xff]
        %v1620 = vld [vmem:[%s1572 + $0xb2] sm:$0xff]
        %s1621 = scalar_lea.vmem [#allocation11], 768
        %v1622 = vld [vmem:[%s1621] sm:$0xff]
        %v1623 = vld [vmem:[%s1621 + $0x8] sm:$0xff]
        %v1624 = vld [vmem:[%s1621 + $0x10] sm:$0xff]
        %v1625 = vld [vmem:[%s1621 + $0x18] sm:$0xff]
        %v1626 = vld [vmem:[%s1621 + $0x20] sm:$0xff]
        %v1627 = vld [vmem:[%s1621 + $0x28] sm:$0xff]
        %v1628 = vld [vmem:[%s1621 + $0x30] sm:$0xff]
        %v1629 = vld [vmem:[%s1621 + $0x38] sm:$0xff]
        %v1630 = vld [vmem:[%s1621 + $0x40] sm:$0xff]
        %v1631 = vld [vmem:[%s1621 + $0x48] sm:$0xff]
        %v1632 = vld [vmem:[%s1621 + $0x50] sm:$0xff]
        %v1633 = vld [vmem:[%s1621 + $0x58] sm:$0xff]
        %v1634 = vld [vmem:[%s1621 + $0x60] sm:$0xff]
        %v1635 = vld [vmem:[%s1621 + $0x68] sm:$0xff]
        %v1636 = vld [vmem:[%s1621 + $0x70] sm:$0xff]
        %v1637 = vld [vmem:[%s1621 + $0x78] sm:$0xff]
        %v1638 = vld [vmem:[%s1621 + $0x80] sm:$0xff]
        %v1639 = vld [vmem:[%s1621 + $0x88] sm:$0xff]
        %v1640 = vld [vmem:[%s1621 + $0x90] sm:$0xff]
        %v1641 = vld [vmem:[%s1621 + $0x98] sm:$0xff]
        %v1642 = vld [vmem:[%s1621 + $0xa0] sm:$0xff]
        %v1643 = vld [vmem:[%s1621 + $0xa8] sm:$0xff]
        %v1644 = vld [vmem:[%s1621 + $0xb0] sm:$0xff]
        %v1645 = vld [vmem:[%s1621 + $0xb8] sm:$0xff]
        %v1646 = vld [vmem:[%s1621 + $0xc0] sm:$0xff]
        %v1647 = vld [vmem:[%s1621 + $0xc8] sm:$0xff]
        %v1648 = vld [vmem:[%s1621 + $0xd0] sm:$0xff]
        %v1649 = vld [vmem:[%s1621 + $0xd8] sm:$0xff]
        %v1650 = vld [vmem:[%s1621 + $0xe0] sm:$0xff]
        %v1651 = vld [vmem:[%s1621 + $0xe8] sm:$0xff]
        %v1652 = vld [vmem:[%s1621 + $0xf0] sm:$0xff]
        %v1653 = vld [vmem:[%s1621 + $0xf8] sm:$0xff]
        %v1654 = vld [vmem:[%s1621 + $0x100] sm:$0xff]
        %v1655 = vld [vmem:[%s1621 + $0x108] sm:$0xff]
        %v1656 = vld [vmem:[%s1621 + $0x110] sm:$0xff]
        %v1657 = vld [vmem:[%s1621 + $0x118] sm:$0xff]
        %v1658 = vld [vmem:[%s1621 + $0x120] sm:$0xff]
        %v1659 = vld [vmem:[%s1621 + $0x128] sm:$0xff]
        %v1660 = vld [vmem:[%s1621 + $0x130] sm:$0xff]
        %v1661 = vld [vmem:[%s1621 + $0x138] sm:$0xff]
        %v1662 = vld [vmem:[%s1621 + $0x140] sm:$0xff]
        %v1663 = vld [vmem:[%s1621 + $0x148] sm:$0xff]
        %v1664 = vld [vmem:[%s1621 + $0x150] sm:$0xff]
        %v1665 = vld [vmem:[%s1621 + $0x158] sm:$0xff]
        %v1666 = vld [vmem:[%s1621 + $0x160] sm:$0xff]
        %v1667 = vld [vmem:[%s1621 + $0x168] sm:$0xff]
        %v1668 = vld [vmem:[%s1621 + $0x170] sm:$0xff]
        %v1669 = vld [vmem:[%s1621 + $0x178] sm:$0xff]
        %1670 = vmatprep.subr.mxu0 0.0
        %1671 = vmatpush1.msra.mxu0 %v1622
        %1672 = vmatprep.subr.mxu0 0.0
        %1673 = vmatpush1.msra.mxu0 %v1623
        %1674 = vmatprep.subr.mxu0 0.0
        %1675 = vmatpush1.msra.mxu0 %v1624
        %1676 = vmatprep.subr.mxu0 0.0
        %1677 = vmatpush1.msra.mxu0 %v1625
        %1678 = vmatprep.subr.mxu0 0.0
        %1679 = vmatpush1.msra.mxu0 %v1626
        %1680 = vmatprep.subr.mxu0 0.0
        %1681 = vmatpush1.msra.mxu0 %v1627
        %1682 = vmatprep.subr.mxu0 0.0
        %1683 = vmatpush1.msra.mxu0 %v1628
        %1684 = vmatprep.subr.mxu0 0.0
        %1685 = vmatpush1.msra.mxu0 %v1629
        %1686 = vmatprep.subr.mxu0 0.0
        %1687 = vmatpush1.msra.mxu0 %v1630
        %1688 = vmatprep.subr.mxu0 0.0
        %1689 = vmatpush1.msra.mxu0 %v1631
        %1690 = vmatprep.subr.mxu0 0.0
        %1691 = vmatpush1.msra.mxu0 %v1632
        %1692 = vmatprep.subr.mxu0 0.0
        %1693 = vmatpush1.msra.mxu0 %v1633
        %1694 = vmatprep.subr.mxu0 0.0
        %1695 = vmatpush1.msra.mxu0 %v1634
        %1696 = vmatprep.subr.mxu0 0.0
        %1697 = vmatpush1.msra.mxu0 %v1635
        %1698 = vmatprep.subr.mxu0 0.0
        %1699 = vmatpush1.msra.mxu0 %v1636
        %1700 = vmatprep.subr.mxu0 0.0
        %1701 = vmatpush1.msra.mxu0 %v1637
        %1702 = vmatprep.subr.mxu0 0.0
        %1703 = vmatpush1.msra.mxu0 %v1638
        %1704 = vmatprep.subr.mxu0 0.0
        %1705 = vmatpush1.msra.mxu0 %v1639
        %1706 = vmatprep.subr.mxu0 0.0
        %1707 = vmatpush1.msra.mxu0 %v1640
        %1708 = vmatprep.subr.mxu0 0.0
        %1709 = vmatpush1.msra.mxu0 %v1641
        %1710 = vmatprep.subr.mxu0 0.0
        %1711 = vmatpush1.msra.mxu0 %v1642
        %1712 = vmatprep.subr.mxu0 0.0
        %1713 = vmatpush1.msra.mxu0 %v1643
        %1714 = vmatprep.subr.mxu0 0.0
        %1715 = vmatpush1.msra.mxu0 %v1644
        %1716 = vmatprep.subr.mxu0 0.0
        %1717 = vmatpush1.msra.mxu0 %v1645
        %1718 = vmatprep.subr.mxu0 0.0
        %1719 = vmatpush1.msra.mxu0 %v1646
        %1720 = vmatprep.subr.mxu0 0.0
        %1721 = vmatpush1.msra.mxu0 %v1647
        %1722 = vmatprep.subr.mxu0 0.0
        %1723 = vmatpush1.msra.mxu0 %v1648
        %1724 = vmatprep.subr.mxu0 0.0
        %1725 = vmatpush1.msra.mxu0 %v1649
        %1726 = vmatprep.subr.mxu0 0.0
        %1727 = vmatpush1.msra.mxu0 %v1650
        %1728 = vmatprep.subr.mxu0 0.0
        %1729 = vmatpush1.msra.mxu0 %v1651
        %1730 = vmatprep.subr.mxu0 0.0
        %1731 = vmatpush1.msra.mxu0 %v1652
        %1732 = vmatprep.subr.mxu0 0.0
        %1733 = vmatpush1.msra.mxu0 %v1653
        %1734 = vmatprep.mubr.f32.mxu0 %v1589
        %1735 = vmatmul.mubr.f32.gmra.mrb[0].mxu0 %v1573
        %v1736 = vpop.f32.mrb[0].mxu0
        %v1737 = vadd.f32 0.0, %v1736
        %v1738 = vpop.f32.mrb[0].mxu0
        %1739 = vmatprep.mubr.f32.mxu0 %v1590
        %1740 = vmatmul.mubr.f32.gmra.mrb[0].mxu0 %v1574
        %v1741 = vpop.f32.mrb[0].mxu0
        %v1742 = vadd.f32 0.0, %v1741
        %v1743 = vpop.f32.mrb[0].mxu0
        %1744 = vmatprep.mubr.f32.mxu0 %v1591
        %1745 = vmatmul.mubr.f32.gmra.mrb[0].mxu0 %v1575
        %v1746 = vpop.f32.mrb[0].mxu0
        %v1747 = vadd.f32 0.0, %v1746
        %v1748 = vpop.f32.mrb[0].mxu0
        %1749 = vmatprep.mubr.f32.mxu0 %v1592
        %1750 = vmatmul.mubr.f32.gmra.mrb[0].mxu0 %v1576
        %v1751 = vpop.f32.mrb[0].mxu0
        %v1752 = vadd.f32 0.0, %v1751
        %v1753 = vpop.f32.mrb[0].mxu0
        %1754 = vmatprep.mubr.f32.mxu0 %v1593
        %1755 = vmatmul.mubr.f32.gmra.mrb[0].mxu0 %v1577
        %v1756 = vpop.f32.mrb[0].mxu0
        %v1757 = vadd.f32 0.0, %v1756
        %v1758 = vpop.f32.mrb[0].mxu0
        %1759 = vmatprep.mubr.f32.mxu0 %v1594
        %1760 = vmatmul.mubr.f32.gmra.mrb[0].mxu0 %v1578
        %v1761 = vpop.f32.mrb[0].mxu0
        %v1762 = vadd.f32 0.0, %v1761
        %v1763 = vpop.f32.mrb[0].mxu0
        %1764 = vmatprep.mubr.f32.mxu0 %v1595
        %1765 = vmatmul.mubr.f32.gmra.mrb[0].mxu0 %v1579
        %v1766 = vpop.f32.mrb[0].mxu0
        %v1767 = vadd.f32 0.0, %v1766
        %v1768 = vpop.f32.mrb[0].mxu0
        %1769 = vmatprep.mubr.f32.mxu0 %v1596
        %1770 = vmatmul.mubr.f32.gmra.mrb[0].mxu0 %v1580
        %v1771 = vpop.f32.mrb[0].mxu0
        %v1772 = vadd.f32 0.0, %v1771
        %v1773 = vpop.f32.mrb[0].mxu0
        %1774 = vmatprep.mubr.f32.mxu0 %v1597
        %1775 = vmatmul.mubr.f32.gmra.mrb[0].mxu0 %v1581
        %v1776 = vpop.f32.mrb[0].mxu0
        %v1777 = vadd.f32 0.0, %v1776
        %v1778 = vpop.f32.mrb[0].mxu0
        %1779 = vmatprep.mubr.f32.mxu0 %v1598
        %1780 = vmatmul.mubr.f32.gmra.mrb[0].mxu0 %v1582
        %v1781 = vpop.f32.mrb[0].mxu0
        %v1782 = vadd.f32 0.0, %v1781
        %v1783 = vpop.f32.mrb[0].mxu0
        %1784 = vmatprep.mubr.f32.mxu0 %v1599
        %1785 = vmatmul.mubr.f32.gmra.mrb[0].mxu0 %v1583
        %v1786 = vpop.f32.mrb[0].mxu0
        %v1787 = vadd.f32 0.0, %v1786
        %v1788 = vpop.f32.mrb[0].mxu0
        %1789 = vmatprep.mubr.f32.mxu0 %v1600
        %1790 = vmatmul.mubr.f32.gmra.mrb[0].mxu0 %v1584
        %v1791 = vpop.f32.mrb[0].mxu0
        %v1792 = vadd.f32 0.0, %v1791
        %v1793 = vpop.f32.mrb[0].mxu0
        %1794 = vmatprep.mubr.f32.mxu0 %v1601
        %1795 = vmatmul.mubr.f32.gmra.mrb[0].mxu0 %v1585
        %v1796 = vpop.f32.mrb[0].mxu0
        %v1797 = vadd.f32 0.0, %v1796
        %v1798 = vpop.f32.mrb[0].mxu0
        %1799 = vmatprep.mubr.f32.mxu0 %v1602
        %1800 = vmatmul.mubr.f32.gmra.mrb[0].mxu0 %v1586
        %v1801 = vpop.f32.mrb[0].mxu0
        %v1802 = vadd.f32 0.0, %v1801
        %v1803 = vpop.f32.mrb[0].mxu0
        %1804 = vmatprep.mubr.f32.mxu0 %v1603
        %1805 = vmatmul.mubr.f32.gmra.mrb[0].mxu0 %v1587
        %v1806 = vpop.f32.mrb[0].mxu0
        %v1807 = vadd.f32 0.0, %v1806
        %v1808 = vpop.f32.mrb[0].mxu0
        %1809 = vmatprep.mubr.f32.mxu0 %v1604
        %1810 = vmatmul.mubr.f32.gmra.mrb[0].mxu0 %v1588
        %v1811 = vpop.f32.mrb[0].mxu0
        %v1812 = vadd.f32 0.0, %v1811
        %v1813 = vpop.f32.mrb[0].mxu0
        %1814 = vdwg.mxu0
        %1815 = vmatprep.subr.mxu0 0.0
        %1816 = vmatpush1.msra.mxu0 %v1654
        %1817 = vmatprep.subr.mxu0 0.0
        %1818 = vmatpush1.msra.mxu0 %v1655
        %1819 = vmatprep.subr.mxu0 0.0
        %1820 = vmatpush1.msra.mxu0 %v1656
        %1821 = vmatprep.subr.mxu0 0.0
        %1822 = vmatpush1.msra.mxu0 %v1657
        %1823 = vmatprep.subr.mxu0 0.0
        %1824 = vmatpush1.msra.mxu0 %v1658
        %1825 = vmatprep.subr.mxu0 0.0
        %1826 = vmatpush1.msra.mxu0 %v1659
        %1827 = vmatprep.subr.mxu0 0.0
        %1828 = vmatpush1.msra.mxu0 %v1660
        %1829 = vmatprep.subr.mxu0 0.0
        %1830 = vmatpush1.msra.mxu0 %v1661
        %1831 = vmatprep.subr.mxu0 0.0
        %1832 = vmatpush1.msra.mxu0 %v1662
        %1833 = vmatprep.subr.mxu0 0.0
        %1834 = vmatpush1.msra.mxu0 %v1663
        %1835 = vmatprep.subr.mxu0 0.0
        %1836 = vmatpush1.msra.mxu0 %v1664
        %1837 = vmatprep.subr.mxu0 0.0
        %1838 = vmatpush1.msra.mxu0 %v1665
        %1839 = vmatprep.subr.mxu0 0.0
        %1840 = vmatpush1.msra.mxu0 %v1666
        %1841 = vmatprep.subr.mxu0 0.0
        %1842 = vmatpush1.msra.mxu0 %v1667
        %1843 = vmatprep.subr.mxu0 0.0
        %1844 = vmatpush1.msra.mxu0 %v1668
        %1845 = vmatprep.subr.mxu0 0.0
        %1846 = vmatpush1.msra.mxu0 %v1669
        %1847 = vmatprep.subr.mxu0 0.0
        %1848 = vmatpush1.msra.mxu0 0.0
        %1849 = vmatprep.subr.mxu0 0.0
        %1850 = vmatpush1.msra.mxu0 0.0
        %1851 = vmatprep.subr.mxu0 0.0
        %1852 = vmatpush1.msra.mxu0 0.0
        %1853 = vmatprep.subr.mxu0 0.0
        %1854 = vmatpush1.msra.mxu0 0.0
        %1855 = vmatprep.subr.mxu0 0.0
        %1856 = vmatpush1.msra.mxu0 0.0
        %1857 = vmatprep.subr.mxu0 0.0
        %1858 = vmatpush1.msra.mxu0 0.0
        %1859 = vmatprep.subr.mxu0 0.0
        %1860 = vmatpush1.msra.mxu0 0.0
        %1861 = vmatprep.subr.mxu0 0.0
        %1862 = vmatpush1.msra.mxu0 0.0
        %1863 = vmatprep.subr.mxu0 0.0
        %1864 = vmatpush1.msra.mxu0 0.0
        %1865 = vmatprep.subr.mxu0 0.0
        %1866 = vmatpush1.msra.mxu0 0.0
        %1867 = vmatprep.subr.mxu0 0.0
        %1868 = vmatpush1.msra.mxu0 0.0
        %1869 = vmatprep.subr.mxu0 0.0
        %1870 = vmatpush1.msra.mxu0 0.0
        %1871 = vmatprep.subr.mxu0 0.0
        %1872 = vmatpush1.msra.mxu0 0.0
        %1873 = vmatprep.subr.mxu0 0.0
        %1874 = vmatpush1.msra.mxu0 0.0
        %1875 = vmatprep.subr.mxu0 0.0
        %1876 = vmatpush1.msra.mxu0 0.0
        %1877 = vmatprep.subr.mxu0 0.0
        %1878 = vmatpush1.msra.mxu0 0.0
        %1879 = vmatprep.mubr.f32.mxu0 0.0
        %1880 = vmatmul.mubr.f32.gmra.mrb[0].mxu0 %v1605
        %v1881 = vpop.f32.mrb[0].mxu0
        %v1882 = vadd.f32 %v1737, %v1881
        %v1883 = vpop.f32.mrb[0].mxu0
        %1884 = vmatprep.mubr.f32.mxu0 0.0
        %1885 = vmatmul.mubr.f32.gmra.mrb[0].mxu0 %v1606
        %v1886 = vpop.f32.mrb[0].mxu0
        %v1887 = vadd.f32 %v1742, %v1886
        %v1888 = vpop.f32.mrb[0].mxu0
        %1889 = vmatprep.mubr.f32.mxu0 0.0
        %1890 = vmatmul.mubr.f32.gmra.mrb[0].mxu0 %v1607
        %v1891 = vpop.f32.mrb[0].mxu0
        %v1892 = vadd.f32 %v1747, %v1891
        %v1893 = vpop.f32.mrb[0].mxu0
        %1894 = vmatprep.mubr.f32.mxu0 0.0
        %1895 = vmatmul.mubr.f32.gmra.mrb[0].mxu0 %v1608
        %v1896 = vpop.f32.mrb[0].mxu0
        %v1897 = vadd.f32 %v1752, %v1896
        %v1898 = vpop.f32.mrb[0].mxu0
        %1899 = vmatprep.mubr.f32.mxu0 0.0
        %1900 = vmatmul.mubr.f32.gmra.mrb[0].mxu0 %v1609
        %v1901 = vpop.f32.mrb[0].mxu0
        %v1902 = vadd.f32 %v1757, %v1901
        %v1903 = vpop.f32.mrb[0].mxu0
        %1904 = vmatprep.mubr.f32.mxu0 0.0
        %1905 = vmatmul.mubr.f32.gmra.mrb[0].mxu0 %v1610
        %v1906 = vpop.f32.mrb[0].mxu0
        %v1907 = vadd.f32 %v1762, %v1906
        %v1908 = vpop.f32.mrb[0].mxu0
        %1909 = vmatprep.mubr.f32.mxu0 0.0
        %1910 = vmatmul.mubr.f32.gmra.mrb[0].mxu0 %v1611
        %v1911 = vpop.f32.mrb[0].mxu0
        %v1912 = vadd.f32 %v1767, %v1911
        %v1913 = vpop.f32.mrb[0].mxu0
        %1914 = vmatprep.mubr.f32.mxu0 0.0
        %1915 = vmatmul.mubr.f32.gmra.mrb[0].mxu0 %v1612
        %v1916 = vpop.f32.mrb[0].mxu0
        %v1917 = vadd.f32 %v1772, %v1916
        %v1918 = vpop.f32.mrb[0].mxu0
        %1919 = vmatprep.mubr.f32.mxu0 0.0
        %1920 = vmatmul.mubr.f32.gmra.mrb[0].mxu0 %v1613
        %v1921 = vpop.f32.mrb[0].mxu0
        %v1922 = vadd.f32 %v1777, %v1921
        %v1923 = vpop.f32.mrb[0].mxu0
        %1924 = vmatprep.mubr.f32.mxu0 0.0
        %1925 = vmatmul.mubr.f32.gmra.mrb[0].mxu0 %v1614
        %v1926 = vpop.f32.mrb[0].mxu0
        %v1927 = vadd.f32 %v1782, %v1926
        %v1928 = vpop.f32.mrb[0].mxu0
        %1929 = vmatprep.mubr.f32.mxu0 0.0
        %1930 = vmatmul.mubr.f32.gmra.mrb[0].mxu0 %v1615
        %v1931 = vpop.f32.mrb[0].mxu0
        %v1932 = vadd.f32 %v1787, %v1931
        %v1933 = vpop.f32.mrb[0].mxu0
        %1934 = vmatprep.mubr.f32.mxu0 0.0
        %1935 = vmatmul.mubr.f32.gmra.mrb[0].mxu0 %v1616
        %v1936 = vpop.f32.mrb[0].mxu0
        %v1937 = vadd.f32 %v1792, %v1936
        %v1938 = vpop.f32.mrb[0].mxu0
        %1939 = vmatprep.mubr.f32.mxu0 0.0
        %1940 = vmatmul.mubr.f32.gmra.mrb[0].mxu0 %v1617
        %v1941 = vpop.f32.mrb[0].mxu0
        %v1942 = vadd.f32 %v1797, %v1941
        %v1943 = vpop.f32.mrb[0].mxu0
        %1944 = vmatprep.mubr.f32.mxu0 0.0
        %1945 = vmatmul.mubr.f32.gmra.mrb[0].mxu0 %v1618
        %v1946 = vpop.f32.mrb[0].mxu0
        %v1947 = vadd.f32 %v1802, %v1946
        %v1948 = vpop.f32.mrb[0].mxu0
        %1949 = vmatprep.mubr.f32.mxu0 0.0
        %1950 = vmatmul.mubr.f32.gmra.mrb[0].mxu0 %v1619
        %v1951 = vpop.f32.mrb[0].mxu0
        %v1952 = vadd.f32 %v1807, %v1951
        %v1953 = vpop.f32.mrb[0].mxu0
        %1954 = vmatprep.mubr.f32.mxu0 0.0
        %1955 = vmatmul.mubr.f32.gmra.mrb[0].mxu0 %v1620
        %v1956 = vpop.f32.mrb[0].mxu0
        %v1957 = vadd.f32 %v1812, %v1956
        %v1958 = vpop.f32.mrb[0].mxu0
        %1959 = vdwg.mxu0
        %v1960 = vadd.f32 %v1494, %v1882
        %v1961 = vadd.f32 %v1499, %v1887
        %v1962 = vadd.f32 %v1504, %v1892
        %v1963 = vadd.f32 %v1509, %v1897
        %v1964 = vadd.f32 %v1514, %v1902
        %v1965 = vadd.f32 %v1519, %v1907
        %v1966 = vadd.f32 %v1524, %v1912
        %v1967 = vadd.f32 %v1529, %v1917
        %v1968 = vadd.f32 %v1534, %v1922
        %v1969 = vadd.f32 %v1539, %v1927
        %v1970 = vadd.f32 %v1544, %v1932
        %v1971 = vadd.f32 %v1549, %v1937
        %v1972 = vadd.f32 %v1554, %v1942
        %v1973 = vadd.f32 %v1559, %v1947
        %v1974 = vadd.f32 %v1564, %v1952
        %v1975 = vadd.f32 %v1569, %v1957
        %v1976 = vld [vmem:[#allocation13] sm:$0x1]
        %v1978 = vlaneseq
        %v1979 = vshrl.u32 %v1978, 7
        %v1980 = vsub.s32 0, %v1979
        %v1981 = vrot.slane %v1976, %v1980
        %v1983 = vadd.f32 %v1960, %v1981
        %v1984 = vadd.f32 %v1961, %v1981
        %v1985 = vadd.f32 %v1962, %v1981
        %v1986 = vadd.f32 %v1963, %v1981
        %v1987 = vadd.f32 %v1964, %v1981
        %v1988 = vadd.f32 %v1965, %v1981
        %v1989 = vadd.f32 %v1966, %v1981
        %v1990 = vadd.f32 %v1967, %v1981
        %v1991 = vadd.f32 %v1968, %v1981
        %v1992 = vadd.f32 %v1969, %v1981
        %v1993 = vadd.f32 %v1970, %v1981
        %v1994 = vadd.f32 %v1971, %v1981
        %v1995 = vadd.f32 %v1972, %v1981
        %v1996 = vadd.f32 %v1973, %v1981
        %v1997 = vadd.f32 %v1974, %v1981
        %v1998 = vadd.f32 %v1975, %v1981
        %v1999 = vmax.f32 %v1983, 0.0
        %v2000 = vmax.f32 %v1984, 0.0
        %v2001 = vmax.f32 %v1985, 0.0
        %v2002 = vmax.f32 %v1986, 0.0
        %v2003 = vmax.f32 %v1987, 0.0
        %v2004 = vmax.f32 %v1988, 0.0
        %v2005 = vmax.f32 %v1989, 0.0
        %v2006 = vmax.f32 %v1990, 0.0
        %v2007 = vmax.f32 %v1991, 0.0
        %v2008 = vmax.f32 %v1992, 0.0
        %v2009 = vmax.f32 %v1993, 0.0
        %v2010 = vmax.f32 %v1994, 0.0
        %v2011 = vmax.f32 %v1995, 0.0
        %v2012 = vmax.f32 %v1996, 0.0
        %v2013 = vmax.f32 %v1997, 0.0
        %v2014 = vmax.f32 %v1998, 0.0
        %v2015 = vld [vmem:[%s274] sm:$0xff]
        %v2016 = vld [vmem:[%s274 + $0x8] sm:$0xff]
        %v2017 = vld [vmem:[%s274 + $0x10] sm:$0xff]
        %v2018 = vld [vmem:[%s274 + $0x18] sm:$0xff]
        %v2019 = vld [vmem:[%s274 + $0x20] sm:$0xff]
        %v2020 = vld [vmem:[%s274 + $0x28] sm:$0xff]
        %v2021 = vld [vmem:[%s274 + $0x30] sm:$0xff]
        %v2022 = vld [vmem:[%s274 + $0x38] sm:$0xff]
        %v2023 = vld [vmem:[%s274 + $0x40] sm:$0xff]
        %v2024 = vld [vmem:[%s274 + $0x48] sm:$0xff]
        %v2025 = vld [vmem:[%s274 + $0x50] sm:$0xff]
        %v2026 = vld [vmem:[%s274 + $0x58] sm:$0xff]
        %v2027 = vld [vmem:[%s274 + $0x60] sm:$0xff]
        %v2028 = vld [vmem:[%s274 + $0x68] sm:$0xff]
        %v2029 = vld [vmem:[%s274 + $0x70] sm:$0xff]
        %v2030 = vld [vmem:[%s274 + $0x78] sm:$0xff]
        %v2031 = vadd.f32 %v1999, %v2015
        %v2032 = vadd.f32 %v2000, %v2016
        %v2033 = vadd.f32 %v2001, %v2017
        %v2034 = vadd.f32 %v2002, %v2018
        %v2035 = vadd.f32 %v2003, %v2019
        %v2036 = vadd.f32 %v2004, %v2020
        %v2037 = vadd.f32 %v2005, %v2021
        %v2038 = vadd.f32 %v2006, %v2022
        %v2039 = vadd.f32 %v2007, %v2023
        %v2040 = vadd.f32 %v2008, %v2024
        %v2041 = vadd.f32 %v2009, %v2025
        %v2042 = vadd.f32 %v2010, %v2026
        %v2043 = vadd.f32 %v2011, %v2027
        %v2044 = vadd.f32 %v2012, %v2028
        %v2045 = vadd.f32 %v2013, %v2029
        %v2046 = vadd.f32 %v2014, %v2030
        %2047 = vst [vmem:[%s316] sm:$0xff] %v2031
        %2048 = vst [vmem:[%s316 + $0x8] sm:$0xff] %v2032
        %2049 = vst [vmem:[%s316 + $0x10] sm:$0xff] %v2033
        %2050 = vst [vmem:[%s316 + $0x18] sm:$0xff] %v2034
        %2051 = vst [vmem:[%s316 + $0x20] sm:$0xff] %v2035
        %2052 = vst [vmem:[%s316 + $0x28] sm:$0xff] %v2036
        %2053 = vst [vmem:[%s316 + $0x30] sm:$0xff] %v2037
        %2054 = vst [vmem:[%s316 + $0x38] sm:$0xff] %v2038
        %2055 = vst [vmem:[%s316 + $0x40] sm:$0xff] %v2039
        %2056 = vst [vmem:[%s316 + $0x48] sm:$0xff] %v2040
        %2057 = vst [vmem:[%s316 + $0x50] sm:$0xff] %v2041
        %2058 = vst [vmem:[%s316 + $0x58] sm:$0xff] %v2042
        %2059 = vst [vmem:[%s316 + $0x60] sm:$0xff] %v2043
        %2060 = vst [vmem:[%s316 + $0x68] sm:$0xff] %v2044
        %2061 = vst [vmem:[%s316 + $0x70] sm:$0xff] %v2045
        %2062 = vst [vmem:[%s316 + $0x78] sm:$0xff] %v2046
        %s2063 = sand.u32 %s159, 1
        %s2064 = scalar_lea.sflag [#allocation7], %s2063
        %s2065 = sand.u32 %s159, 1
        %s2066 = smul.addr %s2065, 128
        %s2067 = scalar_lea.vmem [#allocation14], %s2066
        // Predicated region
        $region93: #{tpu_custom_call.1} parent=39 // pred_check
          %p2068 = pneg %p169
        $region94: #{tpu_custom_call.1} parent=39 // pred_check_branch
          %2070 = sbr.rel (%p2068) target = $region96
        $region95: #{tpu_custom_call.1} parent=39 // pred_region
          %s2071 = smul.u32 8, %s30
          %s2073 = ssub.s32 2048, 2048
          %2074 = vsyncadd %s2064, %s2073
          %s2075 = smul.addr %s2071, 2
          %s2076 = smul.addr %s29, 32
          %s2077 = sadd.s32 %s2075, %s2076
          %s2078 = smul.addr %s2077, 128
          %s2079 = scalar_lea.hbm %s6, %s2078
          %s2080 = sshll.u32 %s2067, 4
          %s2081 = int_to_ptr.vmem [resolvable:$true] %s2080
          %2086 = dma.vmem_to_hbm [thread:$0]  %s2081, 2048, %s2079, %s2064, 128, 128, 8
        $region96: #{tpu_custom_call.1} parent=39 // pred_fallthru
          _
      $region40: #{tpu_custom_call.1} parent=5 // pred_fallthru
        _
      %p2087 = scmp.le.s32.totalorder 2, %s20
      // Predicated region
      $region97: #{tpu_custom_call.1} parent=5 // pred_check
        %p2088 = pneg %p2087
      $region98: #{tpu_custom_call.1} parent=5 // pred_check_branch
        %2090 = sbr.rel (%p2088) target = $region100
      $region99: #{tpu_custom_call.1} parent=5 // pred_region
        %s2091 = ssub.s32 %s20, 2
        // Predicated region
        $region101: #{tpu_custom_call.1} parent=99 // pred_check
          %p2092 = pneg %p175
        $region102: #{tpu_custom_call.1} parent=99 // pred_check_branch
          %2094 = sbr.rel (%p2092) target = $region104
        $region103: #{tpu_custom_call.1} parent=99 // pred_region
          %s2095 = sand.u32 %s160, 1
          %s2096 = scalar_lea.sflag [#allocation7], %s2095
          %s2097 = sand.u32 %s160, 1
          %s2098 = smul.addr %s2097, 128
          %s2099 = scalar_lea.vmem [#allocation14], %s2098
          %2100 = dma.done %s2096, 2048
        $region104: #{tpu_custom_call.1} parent=99 // pred_fallthru
          _
      $region100: #{tpu_custom_call.1} parent=5 // pred_fallthru
        _
    $region6: #{tpu_custom_call.1} parent=1 // loop_footer
      %s24 = sadd.s32 1, %s20
    $region7: #{tpu_custom_call.1} parent=1 // loop_footer_branch
      %19 = sbr.rel target = $region3
    $region8: #{tpu_custom_call.1} parent=1 // loop_exit
      _
    %2101 = vsyncpa [#allocation6], 1
    %s2102 = scalar_lea.sflag [#allocation6], 1
    %2103 = vsyncpa %s2102, 1
    %2104 = vsyncpa [#allocation9], 1
    %2105 = vsyncpa [#allocation12], 1
    %2106 = vsyncpa [#allocation7], 1
    %s2107 = scalar_lea.sflag [#allocation7], 1
    %2108 = vsyncpa %s2107, 1
  %2109 = vsyncmov [#allocation4]
  %s2110 = vpop.sfrf %2109
  %p2111 = scmp.eq.s32.totalorder %s2110, 0
  %p2112 = pneg %p2111
  %2114 = shalt.err (%p2112)
  %s2115 = scalar_lea.sflag [#allocation4], 1
  %2116 = vsyncmov %s2115
  %s2117 = vpop.sfrf %2116
  %p2118 = scmp.eq.s32.totalorder %s2117, 0
  %p2119 = pneg %p2118
  %2121 = shalt.err (%p2119)

</llo_original>
